<compile_context>
chip_gen: v5e
topology: v5e:2x2
jax: 0.10.0
libtpu: 0.0.40
codegen_flags: <defaults>
</compile_context>

<pallas_src>
import functools
import math

import jax
import jax.numpy as jnp
from jax.experimental import pallas as pl
from jax.experimental.pallas import tpu as pltpu


_VMEM = functools.partial(pl.BlockSpec, memory_space=pltpu.MemorySpace.VMEM)

# ---- packed "vecs" slab layout (rows) -------------------------------------
_R_BPROJ = 0    # rows 0..2 : merged QKV projection biases (content, ftr2, ftr3)
_R_BOUT = 3     # fused output-projection bias (4D)
_R_BH1 = 4      # fused head layer-1 bias (6H)
_R_BH2 = 5      # fused head layer-2 bias (136)
_R_MASKW = 6    # rows 6..8 : MaskAttention weights (content, ftr2, ftr3)
_R_AGGW = 9     # aggregator MaskAttention weight
_R_SMW3 = 10    # rows 10..11 : score-mapper third-layer weights (64)
_R_CLS_B1 = 12  # classifier layer-1 bias (BN folded)
_R_CLS_W2 = 13  # classifier layer-2 weight row
_R_SCAL = 14    # packed scalars (lanes below)
# scalar lanes within row _R_SCAL
_L_MASKB = 0    # lanes 0..2 : MaskAttention biases (content, ftr2, ftr3)
_L_AGGB = 3
_L_SMB3 = 4     # lanes 4..5 : score-mapper third-layer biases
_L_CLS_B2 = 6


# ----------------------------------------------------------------------------
# Fused Pallas kernel: whole ARGModel forward (post-BERT) in one program
# ----------------------------------------------------------------------------
def _arg_fused_kernel(feats_ref, masks_ref, wproj_ref, wout_ref, wh1_ref,
                      wh2_ref, wcls1_ref, vecs_ref, out_ref):
    f32 = jnp.float32
    feats = feats_ref[...]                 # (3, B, S, D) [content, ftr2, ftr3]
    masks = masks_ref[...]                 # (3, B, S)
    wproj = wproj_ref[...]                 # (3, D, 6D)
    vecs = vecs_ref[...]                   # (16, WV)
    _, B, S, D = feats.shape
    WP = wproj.shape[-1]                   # 6*D
    H = wh1_ref.shape[-1] // 6
    W2 = wh2_ref.shape[-1]                 # 2*64 + 2*1 + 2*3 = 136

    def recip(x):                          # EUP reciprocal, off the VPU
        return pl.reciprocal(x, approx=True)

    def sigmoid(x):
        return recip(1.0 + jnp.exp(-x))

    def softmax_last(x):
        m = jnp.max(x, axis=-1, keepdims=True)
        e = jnp.exp(x - m)
        return e * recip(jnp.sum(e, axis=-1, keepdims=True))

    # ---- merged per-source Q/K/V projections: 3 matmuls replace 8 nn.Linear ----
    # NOTE: the (B,S,D)<->(B*S,D) reshapes keep the lane axis (D) intact and split
    # the sublane axis at a multiple of 8, so no real relayout is required.
    f2d = feats.reshape(3, B * S, D)
    proj = [jnp.dot(f2d[f], wproj[f], preferred_element_type=f32)
            + vecs[_R_BPROJ + f:_R_BPROJ + f + 1, :WP]
            for f in range(3)]

    def blk(f, j):                         # column block j of source f -> (B, S, D)
        return proj[f][:, j * D:(j + 1) * D].reshape(B, S, D)

    inv_sqrt_d = 1.0 / math.sqrt(D)

    def cross_attn_mean(q3, k3, v3, key_mask):
        """MultiHeadedAttention(h=1) + mean over queries (pre output projection)."""
        s = jnp.einsum('bqd,bkd->bqk', q3, k3,
                       preferred_element_type=f32) * inv_sqrt_d
        s = jnp.where(key_mask[:, None, :] == 0.0, -1e9, s)
        p = softmax_last(s)                               # (B, Sq, Sk)
        # torch.mean(dim=1) folded before V / Wo (all linear); VPU/XLU, no MXU:
        p_bar = jnp.mean(p, axis=1)                       # (B, Sk)
        return jnp.sum(p_bar[:, :, None] * v3, axis=1)    # (B, D)

    cmask, f2mask, f3mask = masks[0], masks[1], masks[2]
    # content proj columns: [K0 V0 K1 V1 Q2 Q3]; ftr2: [Q0 K2 V2]; ftr3: [Q1 K3 V3]
    ctx0 = cross_attn_mean(blk(1, 0), blk(0, 0), blk(0, 1), cmask)    # -> expert_2
    ctx1 = cross_attn_mean(blk(2, 0), blk(0, 2), blk(0, 3), cmask)    # -> expert_3
    ctx2 = cross_attn_mean(blk(0, 4), blk(1, 1), blk(1, 2), f2mask)   # -> mutual_2
    ctx3 = cross_attn_mean(blk(0, 5), blk(2, 1), blk(2, 2), f3mask)   # -> mutual_3

    # ---- all 4 output projections as ONE (B,4D)@(4D,4D) block-diagonal matmul ----
    ctx_all = jnp.concatenate([ctx0, ctx1, ctx2, ctx3], axis=-1)      # (B, 4D)
    pooled = jnp.dot(ctx_all, wout_ref[...], preferred_element_type=f32) \
        + vecs[_R_BOUT:_R_BOUT + 1, :4 * D]
    expert_2 = pooled[:, 0:D]
    expert_3 = pooled[:, D:2 * D]
    mutual_2 = pooled[:, 2 * D:3 * D]
    mutual_3 = pooled[:, 3 * D:4 * D]

    # ---- MaskAttention pools (VPU multiply + reduce, no MXU) ----
    def mask_attn(x3, w_row, b, mask2):
        s = jnp.sum(x3 * w_row.reshape(1, 1, D), axis=-1) + b         # (B, S)
        if mask2 is not None:
            s = jnp.where(mask2 == 0.0, -1e30, s)
        p = softmax_last(s)
        return jnp.sum(p[:, :, None] * x3, axis=1)                    # (B, D)

    scal_row = vecs[_R_SCAL:_R_SCAL + 1, :]
    attn_content = mask_attn(feats[0], vecs[_R_MASKW:_R_MASKW + 1, :D],
                             scal_row[:, _L_MASKB:_L_MASKB + 1], cmask)
    sattn_2 = mask_attn(feats[1], vecs[_R_MASKW + 1:_R_MASKW + 2, :D],
                        scal_row[:, _L_MASKB + 1:_L_MASKB + 2], None)
    sattn_3 = mask_attn(feats[2], vecs[_R_MASKW + 2:_R_MASKW + 3, :D],
                        scal_row[:, _L_MASKB + 2:_L_MASKB + 3], None)

    # ---- 6 MLP heads (hard/simple/score-mapper x {ftr2, ftr3}) as 2 matmuls ----
    x_heads = jnp.concatenate([mutual_2, mutual_3, sattn_2, sattn_3], axis=-1)
    h1 = jnp.maximum(
        jnp.dot(x_heads, wh1_ref[...], preferred_element_type=f32)
        + vecs[_R_BH1:_R_BH1 + 1, :6 * H], 0.0)                        # (B, 6H)
    y2 = jnp.dot(h1, wh2_ref[...], preferred_element_type=f32) \
        + vecs[_R_BH2:_R_BH2 + 1, :W2]                                 # (B, 136)

    sm_hidden_2 = jnp.maximum(y2[:, 0:64], 0.0)       # score-mapper ftr_2 hidden
    sm_hidden_3 = jnp.maximum(y2[:, 64:128], 0.0)     # score-mapper ftr_3 hidden
    hard_pair = sigmoid(y2[:, 128:130])               # [hard_ftr_2 | hard_ftr_3]
    simple_pair = y2[:, 130:136]                      # [simple_ftr_2 | simple_ftr_3]

    # score-mapper Linear(64,1)+Sigmoid as VPU multiply + lane reduce (M = B <= 2)
    rw_score_2 = sigmoid(
        jnp.sum(sm_hidden_2 * vecs[_R_SMW3:_R_SMW3 + 1, :64],
                axis=-1, keepdims=True) + scal_row[:, _L_SMB3:_L_SMB3 + 1])
    rw_score_3 = sigmoid(
        jnp.sum(sm_hidden_3 * vecs[_R_SMW3 + 1:_R_SMW3 + 2, :64],
                axis=-1, keepdims=True) + scal_row[:, _L_SMB3 + 1:_L_SMB3 + 2])

    rw_expert_2 = rw_score_2 * expert_2
    rw_expert_3 = rw_score_3 * expert_3

    # ---- aggregator: MaskAttention over the 3 pooled features (explicit) ----
    aw = vecs[_R_AGGW:_R_AGGW + 1, :D]
    ab = scal_row[:, _L_AGGB:_L_AGGB + 1]
    s0 = jnp.sum(attn_content * aw, axis=-1, keepdims=True) + ab
    s1 = jnp.sum(rw_expert_2 * aw, axis=-1, keepdims=True) + ab
    s2 = jnp.sum(rw_expert_3 * aw, axis=-1, keepdims=True) + ab
    smax = jnp.maximum(jnp.maximum(s0, s1), s2)
    e0 = jnp.exp(s0 - smax)
    e1 = jnp.exp(s1 - smax)
    e2 = jnp.exp(s2 - smax)
    inv = recip(e0 + e1 + e2)
    final = (e0 * attn_content + e1 * rw_expert_2 + e2 * rw_expert_3) * inv

    # ---- classifier MLP (BatchNorm folded, Dropout = identity in eval) ----
    hc = jnp.maximum(
        jnp.dot(final, wcls1_ref[...], preferred_element_type=f32)
        + vecs[_R_CLS_B1:_R_CLS_B1 + 1, :H], 0.0)
    classify = sigmoid(
        jnp.sum(hc * vecs[_R_CLS_W2:_R_CLS_W2 + 1, :H], axis=-1, keepdims=True)
        + scal_row[:, _L_CLS_B2:_L_CLS_B2 + 1])

    # ---- single lane-dense (B, 8D) = (B, 256) store ----
    pad = jnp.zeros((B, 4 * D - 11), f32)
    out_ref[...] = jnp.concatenate(
        [final, attn_content, rw_expert_2, rw_expert_3,
         classify, hard_pair, rw_score_2, rw_score_3, simple_pair, pad], axis=-1)


# ----------------------------------------------------------------------------
# Wrapper
# ----------------------------------------------------------------------------
def arg_forward(fused_params, content_feature, content_masks,
                ftr_2_feature, ftr_2_masks, ftr_3_feature, ftr_3_masks):
    """ARGModel.forward (eval mode), post-BERT, as a single fused Pallas call."""
    w_proj, w_out, w_h1, w_h2, w_cls1, vecs = fused_params
    B, S, D = content_feature.shape
    H = w_h1.shape[-1] // 6
    W2 = w_h2.shape[-1]
    f32 = jnp.float32

    feats = jnp.stack([content_feature, ftr_2_feature, ftr_3_feature]).astype(f32)
    masks = jnp.stack([content_masks, ftr_2_masks, ftr_3_masks]).astype(f32)

    flops = 2 * (3 * B * S * D * 6 * D      # merged QKV projections
                 + 4 * B * S * S * D        # attention score matmuls
                 + B * 4 * D * 4 * D        # block-diag output projection
                 + B * 4 * D * 6 * H        # fused head layer 1
                 + B * 6 * H * W2           # fused head layer 2
                 + B * D * H)               # classifier layer 1
    transcendentals = B * (4 * S * S + 3 * S + 64)
    bytes_accessed = 4 * int(feats.size + masks.size
                             + sum(int(a.size) for a in fused_params)
                             + B * 8 * D)

    out = pl.pallas_call(
        _arg_fused_kernel,
        out_shape=jax.ShapeDtypeStruct((B, 8 * D), f32),
        in_specs=[_VMEM()] * 8,
        out_specs=_VMEM(),
        compiler_params=pltpu.CompilerParams(vmem_limit_bytes=4 * 1024 * 1024),
        cost_estimate=pl.CostEstimate(flops=flops,
                                      transcendentals=transcendentals,
                                      bytes_accessed=bytes_accessed),
    )(feats, masks, w_proj, w_out, w_h1, w_h2, w_cls1, vecs)

    D4 = 4 * D
    return {
        'classify_pred': out[:, D4],
        'gate_value': out[:, D4 + 3:D4 + 5],
        'final_feature': out[:, 0:D],
        'content_feature': out[:, D:2 * D],
        'ftr_2_feature': out[:, 2 * D:3 * D],
        'ftr_3_feature': out[:, 3 * D:4 * D],
        'hard_ftr_2_pred': out[:, D4 + 1],
        'hard_ftr_3_pred': out[:, D4 + 2],
        'simple_ftr_2_pred': out[:, D4 + 5:D4 + 8],
        'simple_ftr_3_pred': out[:, D4 + 8:D4 + 11],
    }


# ----------------------------------------------------------------------------
# Parameters (PyTorch-layout, weights pre-transposed to (in, out))
# ----------------------------------------------------------------------------
def init_params(key, D, H):
    keys = iter(jax.random.split(key, 64))

    def lin(din, dout):
        k1, k2 = jax.random.split(next(keys))
        return (0.05 * jax.random.normal(k1, (din, dout), jnp.float32),
                0.05 * jax.random.normal(k2, (1, dout), jnp.float32))

    def mha():  # MultiHeadedAttention(1, D): 4 Linears (q, k, v, out)
        p = {}
        for n in ('q', 'k', 'v', 'o'):
            w, b = lin(D, D)
            p['w' + n], p['b' + n] = w, b
        return p

    def mask_attn():
        w, b = lin(D, 1)
        return {'w': w, 'b': b}

    def bn(n):  # fresh BatchNorm1d (eval): gamma, beta, running_mean, running_var
        return (jnp.ones((1, n), jnp.float32), jnp.zeros((1, n), jnp.float32),
                jnp.zeros((1, n), jnp.float32), jnp.ones((1, n), jnp.float32))

    def score_mapper():
        return {'l1': lin(D, H), 'bn1': bn(H),
                'l2': lin(H, 64), 'bn2': bn(64),
                'l3': lin(64, 1)}

    return {
        'xattn_content_2': mha(),
        'xattn_content_3': mha(),
        'xattn_ftr_2': mha(),
        'xattn_ftr_3': mha(),
        'content_attention': mask_attn(),
        'simple_ftr_2_attention': mask_attn(),
        'simple_ftr_3_attention': mask_attn(),
        'aggregator': mask_attn(),
        'hard_mlp_ftr_2': [lin(D, H), lin(H, 1)],
        'hard_mlp_ftr_3': [lin(D, H), lin(H, 1)],
        'simple_mlp_ftr_2': [lin(D, H), lin(H, 3)],
        'simple_mlp_ftr_3': [lin(D, H), lin(H, 3)],
        'score_mapper_ftr_2': score_mapper(),
        'score_mapper_ftr_3': score_mapper(),
        'mlp': {'l1': lin(D, H), 'bn1': bn(H), 'lout': lin(H, 1)},
        # co_attention_2/3, hard_ftr_2/3_attention exist in __init__ but are unused
        # in forward(); not instantiated.
    }


def prepare_fused_params(p, eps=1e-5):
    """Pack / fuse all weights into 6 operands; fold eval BatchNorm into Linears."""
    f32 = jnp.float32

    def fold_bn(w, b, bn):
        gamma, beta, mean, var = bn
        scale = gamma / jnp.sqrt(var + eps)
        return (w * scale).astype(f32), ((b - mean) * scale + beta).astype(f32)

    xmods = [p['xattn_content_2'], p['xattn_content_3'],
             p['xattn_ftr_2'], p['xattn_ftr_3']]
    m0, m1, m2, m3 = xmods
    D = m0['wq'].shape[0]
    H = p['hard_mlp_ftr_2'][0][0].shape[1]

    z = jnp.zeros((D, D), f32)
    zb = jnp.zeros((1, D), f32)

    # per-source merged projection weights (3, D, 6D), column blocks of width D:
    #   content: [K0 V0 K1 V1 Q2 Q3]   ftr2: [Q0 K2 V2 0 0 0]   ftr3: [Q1 K3 V3 0 0 0]
    w_proj = jnp.stack([
        jnp.concatenate([m0['wk'], m0['wv'], m1['wk'], m1['wv'],
                         m2['wq'], m3['wq']], axis=1),
        jnp.concatenate([m0['wq'], m2['wk'], m2['wv'], z, z, z], axis=1),
        jnp.concatenate([m1['wq'], m3['wk'], m3['wv'], z, z, z], axis=1),
    ]).astype(f32)
    b_proj = [
        jnp.concatenate([m0['bk'], m0['bv'], m1['bk'], m1['bv'],
                         m2['bq'], m3['bq']], axis=1),
        jnp.concatenate([m0['bq'], m2['bk'], m2['bv'], zb, zb, zb], axis=1),
        jnp.concatenate([m1['bq'], m3['bk'], m3['bv'], zb, zb, zb], axis=1),
    ]

    # block-diagonal fused output projection (4D, 4D), module order m0..m3
    w_out = jnp.zeros((4 * D, 4 * D), f32)
    for i, m in enumerate(xmods):
        w_out = w_out.at[i * D:(i + 1) * D, i * D:(i + 1) * D].set(m['wo'])
    b_out = jnp.concatenate([m['bo'] for m in xmods], axis=1)

    # fused first layer of the 6 heads: (4D, 6H)
    sm2, sm3 = p['score_mapper_ftr_2'], p['score_mapper_ftr_3']
    hw2_1, hb2_1 = p['hard_mlp_ftr_2'][0]
    hw3_1, hb3_1 = p['hard_mlp_ftr_3'][0]
    pw2_1, pb2_1 = fold_bn(*sm2['l1'], sm2['bn1'])
    pw3_1, pb3_1 = fold_bn(*sm3['l1'], sm3['bn1'])
    sw2_1, sb2_1 = p['simple_mlp_ftr_2'][0]
    sw3_1, sb3_1 = p['simple_mlp_ftr_3'][0]
    w_h1 = jnp.zeros((4 * D, 6 * H), f32)
    w_h1 = w_h1.at[0:D, 0:H].set(hw2_1)                   # mutual_2 -> hard_2
    w_h1 = w_h1.at[0:D, H:2 * H].set(pw2_1)               # mutual_2 -> score_mapper_2
    w_h1 = w_h1.at[D:2 * D, 2 * H:3 * H].set(hw3_1)       # mutual_3 -> hard_3
    w_h1 = w_h1.at[D:2 * D, 3 * H:4 * H].set(pw3_1)       # mutual_3 -> score_mapper_3
    w_h1 = w_h1.at[2 * D:3 * D, 4 * H:5 * H].set(sw2_1)   # sattn_2  -> simple_2
    w_h1 = w_h1.at[3 * D:4 * D, 5 * H:6 * H].set(sw3_1)   # sattn_3  -> simple_3
    b_h1 = jnp.concatenate([hb2_1, pb2_1, hb3_1, pb3_1, sb2_1, sb3_1], axis=1)

    # fused second layer of the 6 heads: (6H, 136)
    hw2_2, hb2_2 = p['hard_mlp_ftr_2'][1]
    hw3_2, hb3_2 = p['hard_mlp_ftr_3'][1]
    pw2_2, pb2_2 = fold_bn(*sm2['l2'], sm2['bn2'])
    pw3_2, pb3_2 = fold_bn(*sm3['l2'], sm3['bn2'])
    sw2_2, sb2_2 = p['simple_mlp_ftr_2'][1]
    sw3_2, sb3_2 = p['simple_mlp_ftr_3'][1]
    W2 = 64 + 64 + 1 + 1 + 3 + 3
    w_h2 = jnp.zeros((6 * H, W2), f32)
    w_h2 = w_h2.at[H:2 * H, 0:64].set(pw2_2)              # score_2 hidden
    w_h2 = w_h2.at[3 * H:4 * H, 64:128].set(pw3_2)        # score_3 hidden
    w_h2 = w_h2.at[0:H, 128:129].set(hw2_2)               # hard_2 logit
    w_h2 = w_h2.at[2 * H:3 * H, 129:130].set(hw3_2)       # hard_3 logit
    w_h2 = w_h2.at[4 * H:5 * H, 130:133].set(sw2_2)       # simple_2 logits
    w_h2 = w_h2.at[5 * H:6 * H, 133:136].set(sw3_2)       # simple_3 logits
    b_h2 = jnp.concatenate([pb2_2, pb3_2, hb2_2, hb3_2, sb2_2, sb3_2], axis=1)

    # classifier (BN folded into the first Linear)
    w_cls1, b_cls1 = fold_bn(*p['mlp']['l1'], p['mlp']['bn1'])
    w_cls2, b_cls2 = p['mlp']['lout']

    # packed "vecs" slab: biases + row-vector weights + scalars (row layout = _R_*)
    scalars = jnp.concatenate([
        p['content_attention']['b'], p['simple_ftr_2_attention']['b'],
        p['simple_ftr_3_attention']['b'], p['aggregator']['b'],
        sm2['l3'][1], sm3['l3'][1], b_cls2], axis=1)      # (1, 7)
    rows = [
        b_proj[0], b_proj[1], b_proj[2],
        b_out, b_h1, b_h2,
        p['content_attention']['w'].reshape(1, D),
        p['simple_ftr_2_attention']['w'].reshape(1, D),
        p['simple_ftr_3_attention']['w'].reshape(1, D),
        p['aggregator']['w'].reshape(1, D),
        sm2['l3'][0].reshape(1, 64), sm3['l3'][0].reshape(1, 64),
        b_cls1, w_cls2.reshape(1, H),
        scalars,
    ]
    WV = max(r.shape[1] for r in rows)
    vecs = jnp.concatenate(
        [jnp.pad(r.astype(f32), ((0, 0), (0, WV - r.shape[1]))) for r in rows],
        axis=0)
    vecs = jnp.pad(vecs, ((0, (-vecs.shape[0]) % 8), (0, 0)))

    return (w_proj, w_out, w_h1, w_h2, w_cls1, vecs)


# ----------------------------------------------------------------------------
# Pure-JAX reference of the same forward (raw params, explicit BN) for checking
# ----------------------------------------------------------------------------
def reference_forward(params, content, cmask, ftr2, f2mask, ftr3, f3mask):
    D = content.shape[-1]

    def mha_mean(xq, xkv, mask, p):
        q = xq @ p['wq'] + p['bq']
        k = xkv @ p['wk'] + p['bk']
        v = xkv @ p['wv'] + p['bv']
        s = jnp.einsum('bqd,bkd->bqk', q, k) / math.sqrt(D)
        s = jnp.where(mask[:, None, :] == 0.0, -1e9, s)
        pr = jax.nn.softmax(s, axis=-1)
        ctx = jnp.einsum('bqk,bkd->bqd', pr, v)
        return (ctx @ p['wo'] + p['bo']).mean(axis=1)

    def mask_attn(x, mask, p):
        s = (x @ p['w'])[..., 0] + p['b'][0, 0]
        if mask is not None:
            s = jnp.where(mask == 0.0, -1e30, s)
        pr = jax.nn.softmax(s, axis=-1)
        return jnp.einsum('bs,bsd->bd', pr, x)

    def bn_eval(x, bn):
        gamma, beta, mean, var = bn
        return gamma * (x - mean) / jnp.sqrt(var + 1e-5) + beta

    def two_layer(x, p):
        (w1, b1), (w2, b2) = p
        return jnp.maximum(x @ w1 + b1, 0.0) @ w2 + b2

    expert_2 = mha_mean(ftr2, content, cmask, params['xattn_content_2'])
    expert_3 = mha_mean(ftr3, content, cmask, params['xattn_content_3'])
    mutual_2 = mha_mean(content, ftr2, f2mask, params['xattn_ftr_2'])
    mutual_3 = mha_mean(content, ftr3, f3mask, params['xattn_ftr_3'])

    hard_2 = jax.nn.sigmoid(two_layer(mutual_2, params['hard_mlp_ftr_2']))[:, 0]
    hard_3 = jax.nn.sigmoid(two_layer(mutual_3, params['hard_mlp_ftr_3']))[:, 0]

    simple_2 = two_layer(mask_attn(ftr2, None, params['simple_ftr_2_attention']),
                         params['simple_mlp_ftr_2'])
    simple_3 = two_layer(mask_attn(ftr3, None, params['simple_ftr_3_attention']),
                         params['simple_mlp_ftr_3'])

    attn_content = mask_attn(content, cmask, params['content_attention'])

    def score_mapper(x, p):
        h = jnp.maximum(bn_eval(x @ p['l1'][0] + p['l1'][1], p['bn1']), 0.0)
        h = jnp.maximum(bn_eval(h @ p['l2'][0] + p['l2'][1], p['bn2']), 0.0)
        return jax.nn.sigmoid(h @ p['l3'][0] + p['l3'][1])

    rw2 = score_mapper(mutual_2, params['score_mapper_ftr_2'])
    rw3 = score_mapper(mutual_3, params['score_mapper_ftr_3'])
    rwe2 = rw2 * expert_2
    rwe3 = rw3 * expert_3

    all_feature = jnp.stack([attn_content, rwe2, rwe3], axis=1)
    final = mask_attn(all_feature, None, params['aggregator'])

    mlp = params['mlp']
    h = jnp.maximum(bn_eval(final @ mlp['l1'][0] + mlp['l1'][1], mlp['bn1']), 0.0)
    label = h @ mlp['lout'][0] + mlp['lout'][1]

    return {
        'classify_pred': jax.nn.sigmoid(label[:, 0]),
        'gate_value': jnp.concatenate([rw2, rw3], axis=1),
        'final_feature': final,
        'content_feature': attn_content,
        'ftr_2_feature': rwe2,
        'ftr_3_feature': rwe3,
        'hard_ftr_2_pred': hard_2,
        'hard_ftr_3_pred': hard_3,
        'simple_ftr_2_pred': simple_2,
        'simple_ftr_3_pred': simple_3,
    }


# ----------------------------------------------------------------------------
if __name__ == "__main__":
    B, S, D, H = 2, 16, 32, 32   # batch, seq_len, emb_dim, mlp dims[-1]

    key = jax.random.PRNGKey(0)
    kp, k1, k2, k3 = jax.random.split(key, 4)
    params = init_params(kp, D, H)
    fused = prepare_fused_params(params)

    # TODO(synk): frozen BERT encoders replaced by deterministic random [B,S,D] features.
    content_feature = jax.random.normal(k1, (B, S, D), jnp.float32)
    ftr_2_feature = jax.random.normal(k2, (B, S, D), jnp.float32)
    ftr_3_feature = jax.random.normal(k3, (B, S, D), jnp.float32)

    ar = jnp.arange(S)
    content_masks = jnp.tile((ar < 12).astype(jnp.float32)[None], (B, 1))
    ftr_2_masks = jnp.tile((ar < 14).astype(jnp.float32)[None], (B, 1))
    ftr_3_masks = jnp.tile((ar < 10).astype(jnp.float32)[None], (B, 1))

    fwd = jax.jit(arg_forward)
    out = fwd(fused, content_feature, content_masks,
              ftr_2_feature, ftr_2_masks, ftr_3_feature, ftr_3_masks)
    jax.block_until_ready(out)

    assert out['classify_pred'].shape == (B,)
    assert out['hard_ftr_2_pred'].shape == (B,)
    assert out['hard_ftr_3_pred'].shape == (B,)
    assert out['simple_ftr_2_pred'].shape == (B, 3)
    assert out['simple_ftr_3_pred'].shape == (B, 3)
    assert out['gate_value'].shape == (B, 2)
    assert out['final_feature'].shape == (B, D)

    # numerical check against the pure-JAX reference (same eval-mode math);
    # tolerance 2e-3 leaves margin for the EUP approx reciprocals (rel err ~2^-12).
    ref = reference_forward(params, content_feature, content_masks,
                            ftr_2_feature, ftr_2_masks, ftr_3_feature, ftr_3_masks)
    for name, r in ref.items():
        k_out = out[name]
        assert k_out.shape == r.shape, (name, k_out.shape, r.shape)
        err = float(jnp.max(jnp.abs(k_out - r)))
        assert err < 2e-3, (name, err)

    print("KERNEL_OK")
</pallas_src>

<mosaic_0001>
module attributes {stable_mosaic.version = 11 : i64} {
  func.func @_arg_fused_kernel(%arg0: memref<3x2x16x32xf32, #tpu.memory_space<vmem>>, %arg1: memref<3x2x16xf32, #tpu.memory_space<vmem>>, %arg2: memref<3x32x192xf32, #tpu.memory_space<vmem>>, %arg3: memref<128x128xf32, #tpu.memory_space<vmem>>, %arg4: memref<128x192xf32, #tpu.memory_space<vmem>>, %arg5: memref<192x136xf32, #tpu.memory_space<vmem>>, %arg6: memref<32x32xf32, #tpu.memory_space<vmem>>, %arg7: memref<16x192xf32, #tpu.memory_space<vmem>>, %arg8: memref<2x256xf32, #tpu.memory_space<vmem>>) attributes {dimension_semantics = [], scalar_prefetch = 0 : i64, scratch_operands = 0 : i64, tpu.core_type = #tpu.core_type<tc>} {
    %c0 = arith.constant 0 : index
    %c0_0 = arith.constant 0 : index
    %c0_1 = arith.constant 0 : index
    %c0_2 = arith.constant 0 : index
    %0 = vector.load %arg0[%c0, %c0_0, %c0_1, %c0_2] : memref<3x2x16x32xf32, #tpu.memory_space<vmem>>, vector<3x2x16x32xf32>
    %c0_3 = arith.constant 0 : index
    %c0_4 = arith.constant 0 : index
    %c0_5 = arith.constant 0 : index
    %1 = vector.load %arg1[%c0_3, %c0_4, %c0_5] : memref<3x2x16xf32, #tpu.memory_space<vmem>>, vector<3x2x16xf32>
    %c0_6 = arith.constant 0 : index
    %c0_7 = arith.constant 0 : index
    %c0_8 = arith.constant 0 : index
    %2 = vector.load %arg2[%c0_6, %c0_7, %c0_8] : memref<3x32x192xf32, #tpu.memory_space<vmem>>, vector<3x32x192xf32>
    %c0_9 = arith.constant 0 : index
    %c0_10 = arith.constant 0 : index
    %3 = vector.load %arg7[%c0_9, %c0_10] : memref<16x192xf32, #tpu.memory_space<vmem>>, vector<16x192xf32>
    %4 = vector.shape_cast %0 : vector<3x2x16x32xf32> to vector<3x32x32xf32>
    %5 = vector.extract_strided_slice %4 {offsets = [0, 0, 0], sizes = [1, 32, 32], strides = [1, 1, 1]} : vector<3x32x32xf32> to vector<1x32x32xf32>
    %6 = vector.shape_cast %5 : vector<1x32x32xf32> to vector<32x32xf32>
    %7 = vector.extract_strided_slice %2 {offsets = [0, 0, 0], sizes = [1, 32, 192], strides = [1, 1, 1]} : vector<3x32x192xf32> to vector<1x32x192xf32>
    %8 = vector.shape_cast %7 : vector<1x32x192xf32> to vector<32x192xf32>
    %cst = arith.constant dense<0.000000e+00> : vector<32x192xf32>
    %9 = tpu.matmul %6, %8, %cst {dimension_numbers = #tpu.dot_dimension_numbers<[1], [0], [0], [1], [0, 0, 1, 1], [], []>} : vector<32x32xf32>, vector<32x192xf32>, vector<32x192xf32> -> vector<32x192xf32>
    %10 = vector.extract_strided_slice %3 {offsets = [0, 0], sizes = [1, 192], strides = [1, 1]} : vector<16x192xf32> to vector<1x192xf32>
    %11 = vector.broadcast %10 : vector<1x192xf32> to vector<32x192xf32>
    %12 = arith.addf %9, %11 : vector<32x192xf32>
    %13 = vector.extract_strided_slice %4 {offsets = [1, 0, 0], sizes = [1, 32, 32], strides = [1, 1, 1]} : vector<3x32x32xf32> to vector<1x32x32xf32>
    %14 = vector.shape_cast %13 : vector<1x32x32xf32> to vector<32x32xf32>
    %15 = vector.extract_strided_slice %2 {offsets = [1, 0, 0], sizes = [1, 32, 192], strides = [1, 1, 1]} : vector<3x32x192xf32> to vector<1x32x192xf32>
    %16 = vector.shape_cast %15 : vector<1x32x192xf32> to vector<32x192xf32>
    %cst_11 = arith.constant dense<0.000000e+00> : vector<32x192xf32>
    %17 = tpu.matmul %14, %16, %cst_11 {dimension_numbers = #tpu.dot_dimension_numbers<[1], [0], [0], [1], [0, 0, 1, 1], [], []>} : vector<32x32xf32>, vector<32x192xf32>, vector<32x192xf32> -> vector<32x192xf32>
    %18 = vector.extract_strided_slice %3 {offsets = [1, 0], sizes = [1, 192], strides = [1, 1]} : vector<16x192xf32> to vector<1x192xf32>
    %19 = vector.broadcast %18 : vector<1x192xf32> to vector<32x192xf32>
    %20 = arith.addf %17, %19 : vector<32x192xf32>
    %21 = vector.extract_strided_slice %4 {offsets = [2, 0, 0], sizes = [1, 32, 32], strides = [1, 1, 1]} : vector<3x32x32xf32> to vector<1x32x32xf32>
    %22 = vector.shape_cast %21 : vector<1x32x32xf32> to vector<32x32xf32>
    %23 = vector.extract_strided_slice %2 {offsets = [2, 0, 0], sizes = [1, 32, 192], strides = [1, 1, 1]} : vector<3x32x192xf32> to vector<1x32x192xf32>
    %24 = vector.shape_cast %23 : vector<1x32x192xf32> to vector<32x192xf32>
    %cst_12 = arith.constant dense<0.000000e+00> : vector<32x192xf32>
    %25 = tpu.matmul %22, %24, %cst_12 {dimension_numbers = #tpu.dot_dimension_numbers<[1], [0], [0], [1], [0, 0, 1, 1], [], []>} : vector<32x32xf32>, vector<32x192xf32>, vector<32x192xf32> -> vector<32x192xf32>
    %26 = vector.extract_strided_slice %3 {offsets = [2, 0], sizes = [1, 192], strides = [1, 1]} : vector<16x192xf32> to vector<1x192xf32>
    %27 = vector.broadcast %26 : vector<1x192xf32> to vector<32x192xf32>
    %28 = arith.addf %25, %27 : vector<32x192xf32>
    %29 = vector.extract_strided_slice %1 {offsets = [0, 0, 0], sizes = [1, 2, 16], strides = [1, 1, 1]} : vector<3x2x16xf32> to vector<1x2x16xf32>
    %30 = vector.shape_cast %29 : vector<1x2x16xf32> to vector<2x16xf32>
    %31 = vector.extract_strided_slice %1 {offsets = [1, 0, 0], sizes = [1, 2, 16], strides = [1, 1, 1]} : vector<3x2x16xf32> to vector<1x2x16xf32>
    %32 = vector.shape_cast %31 : vector<1x2x16xf32> to vector<2x16xf32>
    %33 = vector.extract_strided_slice %1 {offsets = [2, 0, 0], sizes = [1, 2, 16], strides = [1, 1, 1]} : vector<3x2x16xf32> to vector<1x2x16xf32>
    %34 = vector.shape_cast %33 : vector<1x2x16xf32> to vector<2x16xf32>
    %35 = vector.extract_strided_slice %20 {offsets = [0, 0], sizes = [32, 32], strides = [1, 1]} : vector<32x192xf32> to vector<32x32xf32>
    %36 = vector.shape_cast %35 : vector<32x32xf32> to vector<2x16x32xf32>
    %37 = vector.extract_strided_slice %12 {offsets = [0, 0], sizes = [32, 32], strides = [1, 1]} : vector<32x192xf32> to vector<32x32xf32>
    %38 = vector.shape_cast %37 : vector<32x32xf32> to vector<2x16x32xf32>
    %39 = vector.extract_strided_slice %12 {offsets = [0, 32], sizes = [32, 32], strides = [1, 1]} : vector<32x192xf32> to vector<32x32xf32>
    %40 = vector.shape_cast %39 : vector<32x32xf32> to vector<2x16x32xf32>
    "tpu.trace_start"() <{level = 10 : i32, message = "bqd,bkd->bqk"}> : () -> ()
    %cst_13 = arith.constant dense<0.000000e+00> : vector<2x16x16xf32>
    %41 = tpu.matmul %36, %38, %cst_13 {dimension_numbers = #tpu.dot_dimension_numbers<[2], [2], [1], [1], [0, 0, 0, 1, 1, 1], [0], [0]>} : vector<2x16x32xf32>, vector<2x16x32xf32>, vector<2x16x16xf32> -> vector<2x16x16xf32>
    "tpu.trace_stop"() : () -> ()
    %cst_14 = arith.constant 0.176776692 : f32
    %42 = vector.broadcast %cst_14 : f32 to vector<2x16x16xf32>
    %43 = arith.mulf %41, %42 : vector<2x16x16xf32>
    %44 = vector.shape_cast %30 : vector<2x16xf32> to vector<2x1x16xf32>
    %cst_15 = arith.constant 0.000000e+00 : f32
    %45 = vector.broadcast %cst_15 : f32 to vector<2x1x16xf32>
    %46 = arith.cmpf oeq, %44, %45 : vector<2x1x16xf32>
    %cst_16 = arith.constant -1.000000e+09 : f32
    %47 = vector.shape_cast %46 : vector<2x1x16xi1> to vector<2x1x16xi1>
    %48 = vector.broadcast %47 : vector<2x1x16xi1> to vector<2x16x16xi1>
    %49 = vector.broadcast %cst_16 : f32 to vector<2x16x16xf32>
    %50 = arith.select %48, %49, %43 : vector<2x16x16xi1>, vector<2x16x16xf32>
    %cst_17 = arith.constant dense<0xFF800000> : vector<2x16xf32>
    %51 = vector.multi_reduction <maximumf>, %50, %cst_17 [2] : vector<2x16x16xf32> to vector<2x16xf32>
    %52 = vector.shape_cast %51 : vector<2x16xf32> to vector<2x16x1xf32>
    %53 = vector.broadcast %52 : vector<2x16x1xf32> to vector<2x16x16xf32>
    %54 = arith.subf %50, %53 : vector<2x16x16xf32>
    %55 = math.exp %54 : vector<2x16x16xf32>
    %cst_18 = arith.constant dense<0.000000e+00> : vector<2x16xf32>
    %56 = vector.multi_reduction <add>, %55, %cst_18 [2] : vector<2x16x16xf32> to vector<2x16xf32>
    %57 = vector.shape_cast %56 : vector<2x16xf32> to vector<2x16x1xf32>
    %58 = tpu.reciprocal %57 {approx = true} : vector<2x16x1xf32> -> vector<2x16x1xf32>
    %59 = vector.broadcast %58 : vector<2x16x1xf32> to vector<2x16x16xf32>
    %60 = arith.mulf %55, %59 : vector<2x16x16xf32>
    %cst_19 = arith.constant dense<0.000000e+00> : vector<2x16xf32>
    %61 = vector.multi_reduction <add>, %60, %cst_19 [1] : vector<2x16x16xf32> to vector<2x16xf32>
    %cst_20 = arith.constant 1.600000e+01 : f32
    %62 = vector.broadcast %cst_20 : f32 to vector<2x16xf32>
    %63 = arith.divf %61, %62 : vector<2x16xf32>
    %64 = vector.shape_cast %63 : vector<2x16xf32> to vector<2x16x1xf32>
    %65 = vector.broadcast %64 : vector<2x16x1xf32> to vector<2x16x32xf32>
    %66 = arith.mulf %65, %40 : vector<2x16x32xf32>
    %cst_21 = arith.constant dense<0.000000e+00> : vector<2x32xf32>
    %67 = vector.multi_reduction <add>, %66, %cst_21 [1] : vector<2x16x32xf32> to vector<2x32xf32>
    %68 = vector.extract_strided_slice %28 {offsets = [0, 0], sizes = [32, 32], strides = [1, 1]} : vector<32x192xf32> to vector<32x32xf32>
    %69 = vector.shape_cast %68 : vector<32x32xf32> to vector<2x16x32xf32>
    %70 = vector.extract_strided_slice %12 {offsets = [0, 64], sizes = [32, 32], strides = [1, 1]} : vector<32x192xf32> to vector<32x32xf32>
    %71 = vector.shape_cast %70 : vector<32x32xf32> to vector<2x16x32xf32>
    %72 = vector.extract_strided_slice %12 {offsets = [0, 96], sizes = [32, 32], strides = [1, 1]} : vector<32x192xf32> to vector<32x32xf32>
    %73 = vector.shape_cast %72 : vector<32x32xf32> to vector<2x16x32xf32>
    "tpu.trace_start"() <{level = 10 : i32, message = "bqd,bkd->bqk"}> : () -> ()
    %cst_22 = arith.constant dense<0.000000e+00> : vector<2x16x16xf32>
    %74 = tpu.matmul %69, %71, %cst_22 {dimension_numbers = #tpu.dot_dimension_numbers<[2], [2], [1], [1], [0, 0, 0, 1, 1, 1], [0], [0]>} : vector<2x16x32xf32>, vector<2x16x32xf32>, vector<2x16x16xf32> -> vector<2x16x16xf32>
    "tpu.trace_stop"() : () -> ()
    %cst_23 = arith.constant 0.176776692 : f32
    %75 = vector.broadcast %cst_23 : f32 to vector<2x16x16xf32>
    %76 = arith.mulf %74, %75 : vector<2x16x16xf32>
    %77 = vector.shape_cast %30 : vector<2x16xf32> to vector<2x1x16xf32>
    %cst_24 = arith.constant 0.000000e+00 : f32
    %78 = vector.broadcast %cst_24 : f32 to vector<2x1x16xf32>
    %79 = arith.cmpf oeq, %77, %78 : vector<2x1x16xf32>
    %cst_25 = arith.constant -1.000000e+09 : f32
    %80 = vector.shape_cast %79 : vector<2x1x16xi1> to vector<2x1x16xi1>
    %81 = vector.broadcast %80 : vector<2x1x16xi1> to vector<2x16x16xi1>
    %82 = vector.broadcast %cst_25 : f32 to vector<2x16x16xf32>
    %83 = arith.select %81, %82, %76 : vector<2x16x16xi1>, vector<2x16x16xf32>
    %cst_26 = arith.constant dense<0xFF800000> : vector<2x16xf32>
    %84 = vector.multi_reduction <maximumf>, %83, %cst_26 [2] : vector<2x16x16xf32> to vector<2x16xf32>
    %85 = vector.shape_cast %84 : vector<2x16xf32> to vector<2x16x1xf32>
    %86 = vector.broadcast %85 : vector<2x16x1xf32> to vector<2x16x16xf32>
    %87 = arith.subf %83, %86 : vector<2x16x16xf32>
    %88 = math.exp %87 : vector<2x16x16xf32>
    %cst_27 = arith.constant dense<0.000000e+00> : vector<2x16xf32>
    %89 = vector.multi_reduction <add>, %88, %cst_27 [2] : vector<2x16x16xf32> to vector<2x16xf32>
    %90 = vector.shape_cast %89 : vector<2x16xf32> to vector<2x16x1xf32>
    %91 = tpu.reciprocal %90 {approx = true} : vector<2x16x1xf32> -> vector<2x16x1xf32>
    %92 = vector.broadcast %91 : vector<2x16x1xf32> to vector<2x16x16xf32>
    %93 = arith.mulf %88, %92 : vector<2x16x16xf32>
    %cst_28 = arith.constant dense<0.000000e+00> : vector<2x16xf32>
    %94 = vector.multi_reduction <add>, %93, %cst_28 [1] : vector<2x16x16xf32> to vector<2x16xf32>
    %cst_29 = arith.constant 1.600000e+01 : f32
    %95 = vector.broadcast %cst_29 : f32 to vector<2x16xf32>
    %96 = arith.divf %94, %95 : vector<2x16xf32>
    %97 = vector.shape_cast %96 : vector<2x16xf32> to vector<2x16x1xf32>
    %98 = vector.broadcast %97 : vector<2x16x1xf32> to vector<2x16x32xf32>
    %99 = arith.mulf %98, %73 : vector<2x16x32xf32>
    %cst_30 = arith.constant dense<0.000000e+00> : vector<2x32xf32>
    %100 = vector.multi_reduction <add>, %99, %cst_30 [1] : vector<2x16x32xf32> to vector<2x32xf32>
    %101 = vector.extract_strided_slice %12 {offsets = [0, 128], sizes = [32, 32], strides = [1, 1]} : vector<32x192xf32> to vector<32x32xf32>
    %102 = vector.shape_cast %101 : vector<32x32xf32> to vector<2x16x32xf32>
    %103 = vector.extract_strided_slice %20 {offsets = [0, 32], sizes = [32, 32], strides = [1, 1]} : vector<32x192xf32> to vector<32x32xf32>
    %104 = vector.shape_cast %103 : vector<32x32xf32> to vector<2x16x32xf32>
    %105 = vector.extract_strided_slice %20 {offsets = [0, 64], sizes = [32, 32], strides = [1, 1]} : vector<32x192xf32> to vector<32x32xf32>
    %106 = vector.shape_cast %105 : vector<32x32xf32> to vector<2x16x32xf32>
    "tpu.trace_start"() <{level = 10 : i32, message = "bqd,bkd->bqk"}> : () -> ()
    %cst_31 = arith.constant dense<0.000000e+00> : vector<2x16x16xf32>
    %107 = tpu.matmul %102, %104, %cst_31 {dimension_numbers = #tpu.dot_dimension_numbers<[2], [2], [1], [1], [0, 0, 0, 1, 1, 1], [0], [0]>} : vector<2x16x32xf32>, vector<2x16x32xf32>, vector<2x16x16xf32> -> vector<2x16x16xf32>
    "tpu.trace_stop"() : () -> ()
    %cst_32 = arith.constant 0.176776692 : f32
    %108 = vector.broadcast %cst_32 : f32 to vector<2x16x16xf32>
    %109 = arith.mulf %107, %108 : vector<2x16x16xf32>
    %110 = vector.shape_cast %32 : vector<2x16xf32> to vector<2x1x16xf32>
    %cst_33 = arith.constant 0.000000e+00 : f32
    %111 = vector.broadcast %cst_33 : f32 to vector<2x1x16xf32>
    %112 = arith.cmpf oeq, %110, %111 : vector<2x1x16xf32>
    %cst_34 = arith.constant -1.000000e+09 : f32
    %113 = vector.shape_cast %112 : vector<2x1x16xi1> to vector<2x1x16xi1>
    %114 = vector.broadcast %113 : vector<2x1x16xi1> to vector<2x16x16xi1>
    %115 = vector.broadcast %cst_34 : f32 to vector<2x16x16xf32>
    %116 = arith.select %114, %115, %109 : vector<2x16x16xi1>, vector<2x16x16xf32>
    %cst_35 = arith.constant dense<0xFF800000> : vector<2x16xf32>
    %117 = vector.multi_reduction <maximumf>, %116, %cst_35 [2] : vector<2x16x16xf32> to vector<2x16xf32>
    %118 = vector.shape_cast %117 : vector<2x16xf32> to vector<2x16x1xf32>
    %119 = vector.broadcast %118 : vector<2x16x1xf32> to vector<2x16x16xf32>
    %120 = arith.subf %116, %119 : vector<2x16x16xf32>
    %121 = math.exp %120 : vector<2x16x16xf32>
    %cst_36 = arith.constant dense<0.000000e+00> : vector<2x16xf32>
    %122 = vector.multi_reduction <add>, %121, %cst_36 [2] : vector<2x16x16xf32> to vector<2x16xf32>
    %123 = vector.shape_cast %122 : vector<2x16xf32> to vector<2x16x1xf32>
    %124 = tpu.reciprocal %123 {approx = true} : vector<2x16x1xf32> -> vector<2x16x1xf32>
    %125 = vector.broadcast %124 : vector<2x16x1xf32> to vector<2x16x16xf32>
    %126 = arith.mulf %121, %125 : vector<2x16x16xf32>
    %cst_37 = arith.constant dense<0.000000e+00> : vector<2x16xf32>
    %127 = vector.multi_reduction <add>, %126, %cst_37 [1] : vector<2x16x16xf32> to vector<2x16xf32>
    %cst_38 = arith.constant 1.600000e+01 : f32
    %128 = vector.broadcast %cst_38 : f32 to vector<2x16xf32>
    %129 = arith.divf %127, %128 : vector<2x16xf32>
    %130 = vector.shape_cast %129 : vector<2x16xf32> to vector<2x16x1xf32>
    %131 = vector.broadcast %130 : vector<2x16x1xf32> to vector<2x16x32xf32>
    %132 = arith.mulf %131, %106 : vector<2x16x32xf32>
    %cst_39 = arith.constant dense<0.000000e+00> : vector<2x32xf32>
    %133 = vector.multi_reduction <add>, %132, %cst_39 [1] : vector<2x16x32xf32> to vector<2x32xf32>
    %134 = vector.extract_strided_slice %12 {offsets = [0, 160], sizes = [32, 32], strides = [1, 1]} : vector<32x192xf32> to vector<32x32xf32>
    %135 = vector.shape_cast %134 : vector<32x32xf32> to vector<2x16x32xf32>
    %136 = vector.extract_strided_slice %28 {offsets = [0, 32], sizes = [32, 32], strides = [1, 1]} : vector<32x192xf32> to vector<32x32xf32>
    %137 = vector.shape_cast %136 : vector<32x32xf32> to vector<2x16x32xf32>
    %138 = vector.extract_strided_slice %28 {offsets = [0, 64], sizes = [32, 32], strides = [1, 1]} : vector<32x192xf32> to vector<32x32xf32>
    %139 = vector.shape_cast %138 : vector<32x32xf32> to vector<2x16x32xf32>
    "tpu.trace_start"() <{level = 10 : i32, message = "bqd,bkd->bqk"}> : () -> ()
    %cst_40 = arith.constant dense<0.000000e+00> : vector<2x16x16xf32>
    %140 = tpu.matmul %135, %137, %cst_40 {dimension_numbers = #tpu.dot_dimension_numbers<[2], [2], [1], [1], [0, 0, 0, 1, 1, 1], [0], [0]>} : vector<2x16x32xf32>, vector<2x16x32xf32>, vector<2x16x16xf32> -> vector<2x16x16xf32>
    "tpu.trace_stop"() : () -> ()
    %cst_41 = arith.constant 0.176776692 : f32
    %141 = vector.broadcast %cst_41 : f32 to vector<2x16x16xf32>
    %142 = arith.mulf %140, %141 : vector<2x16x16xf32>
    %143 = vector.shape_cast %34 : vector<2x16xf32> to vector<2x1x16xf32>
    %cst_42 = arith.constant 0.000000e+00 : f32
    %144 = vector.broadcast %cst_42 : f32 to vector<2x1x16xf32>
    %145 = arith.cmpf oeq, %143, %144 : vector<2x1x16xf32>
    %cst_43 = arith.constant -1.000000e+09 : f32
    %146 = vector.shape_cast %145 : vector<2x1x16xi1> to vector<2x1x16xi1>
    %147 = vector.broadcast %146 : vector<2x1x16xi1> to vector<2x16x16xi1>
    %148 = vector.broadcast %cst_43 : f32 to vector<2x16x16xf32>
    %149 = arith.select %147, %148, %142 : vector<2x16x16xi1>, vector<2x16x16xf32>
    %cst_44 = arith.constant dense<0xFF800000> : vector<2x16xf32>
    %150 = vector.multi_reduction <maximumf>, %149, %cst_44 [2] : vector<2x16x16xf32> to vector<2x16xf32>
    %151 = vector.shape_cast %150 : vector<2x16xf32> to vector<2x16x1xf32>
    %152 = vector.broadcast %151 : vector<2x16x1xf32> to vector<2x16x16xf32>
    %153 = arith.subf %149, %152 : vector<2x16x16xf32>
    %154 = math.exp %153 : vector<2x16x16xf32>
    %cst_45 = arith.constant dense<0.000000e+00> : vector<2x16xf32>
    %155 = vector.multi_reduction <add>, %154, %cst_45 [2] : vector<2x16x16xf32> to vector<2x16xf32>
    %156 = vector.shape_cast %155 : vector<2x16xf32> to vector<2x16x1xf32>
    %157 = tpu.reciprocal %156 {approx = true} : vector<2x16x1xf32> -> vector<2x16x1xf32>
    %158 = vector.broadcast %157 : vector<2x16x1xf32> to vector<2x16x16xf32>
    %159 = arith.mulf %154, %158 : vector<2x16x16xf32>
    %cst_46 = arith.constant dense<0.000000e+00> : vector<2x16xf32>
    %160 = vector.multi_reduction <add>, %159, %cst_46 [1] : vector<2x16x16xf32> to vector<2x16xf32>
    %cst_47 = arith.constant 1.600000e+01 : f32
    %161 = vector.broadcast %cst_47 : f32 to vector<2x16xf32>
    %162 = arith.divf %160, %161 : vector<2x16xf32>
    %163 = vector.shape_cast %162 : vector<2x16xf32> to vector<2x16x1xf32>
    %164 = vector.broadcast %163 : vector<2x16x1xf32> to vector<2x16x32xf32>
    %165 = arith.mulf %164, %139 : vector<2x16x32xf32>
    %cst_48 = arith.constant dense<0.000000e+00> : vector<2x32xf32>
    %166 = vector.multi_reduction <add>, %165, %cst_48 [1] : vector<2x16x32xf32> to vector<2x32xf32>
    %167 = tpu.concatenate %67, %100, %133, %166 in 1 : vector<2x32xf32>, vector<2x32xf32>, vector<2x32xf32>, vector<2x32xf32> -> vector<2x128xf32>
    %c0_49 = arith.constant 0 : index
    %c0_50 = arith.constant 0 : index
    %168 = vector.load %arg3[%c0_49, %c0_50] : memref<128x128xf32, #tpu.memory_space<vmem>>, vector<128x128xf32>
    %cst_51 = arith.constant dense<0.000000e+00> : vector<2x128xf32>
    %169 = tpu.matmul %167, %168, %cst_51 {dimension_numbers = #tpu.dot_dimension_numbers<[1], [0], [0], [1], [0, 0, 1, 1], [], []>} : vector<2x128xf32>, vector<128x128xf32>, vector<2x128xf32> -> vector<2x128xf32>
    %170 = vector.extract_strided_slice %3 {offsets = [3, 0], sizes = [1, 128], strides = [1, 1]} : vector<16x192xf32> to vector<1x128xf32>
    %171 = vector.broadcast %170 : vector<1x128xf32> to vector<2x128xf32>
    %172 = arith.addf %169, %171 : vector<2x128xf32>
    %173 = vector.extract_strided_slice %172 {offsets = [0, 0], sizes = [2, 32], strides = [1, 1]} : vector<2x128xf32> to vector<2x32xf32>
    %174 = vector.extract_strided_slice %172 {offsets = [0, 32], sizes = [2, 32], strides = [1, 1]} : vector<2x128xf32> to vector<2x32xf32>
    %175 = vector.extract_strided_slice %172 {offsets = [0, 64], sizes = [2, 32], strides = [1, 1]} : vector<2x128xf32> to vector<2x32xf32>
    %176 = vector.extract_strided_slice %172 {offsets = [0, 96], sizes = [2, 32], strides = [1, 1]} : vector<2x128xf32> to vector<2x32xf32>
    %177 = vector.extract_strided_slice %3 {offsets = [14, 0], sizes = [1, 192], strides = [1, 1]} : vector<16x192xf32> to vector<1x192xf32>
    %178 = vector.extract_strided_slice %0 {offsets = [0, 0, 0, 0], sizes = [1, 2, 16, 32], strides = [1, 1, 1, 1]} : vector<3x2x16x32xf32> to vector<1x2x16x32xf32>
    %179 = vector.shape_cast %178 : vector<1x2x16x32xf32> to vector<2x16x32xf32>
    %180 = vector.extract_strided_slice %3 {offsets = [6, 0], sizes = [1, 32], strides = [1, 1]} : vector<16x192xf32> to vector<1x32xf32>
    %181 = vector.extract_strided_slice %177 {offsets = [0, 0], sizes = [1, 1], strides = [1, 1]} : vector<1x192xf32> to vector<1x1xf32>
    %182 = vector.shape_cast %180 : vector<1x32xf32> to vector<1x1x32xf32>
    %183 = vector.broadcast %182 : vector<1x1x32xf32> to vector<2x16x32xf32>
    %184 = arith.mulf %179, %183 : vector<2x16x32xf32>
    %cst_52 = arith.constant dense<0.000000e+00> : vector<2x16xf32>
    %185 = vector.multi_reduction <add>, %184, %cst_52 [2] : vector<2x16x32xf32> to vector<2x16xf32>
    %186 = vector.broadcast %181 : vector<1x1xf32> to vector<2x16xf32>
    %187 = arith.addf %185, %186 : vector<2x16xf32>
    %cst_53 = arith.constant 0.000000e+00 : f32
    %188 = vector.broadcast %cst_53 : f32 to vector<2x16xf32>
    %189 = arith.cmpf oeq, %30, %188 : vector<2x16xf32>
    %cst_54 = arith.constant -1.000000e+30 : f32
    %190 = vector.broadcast %cst_54 : f32 to vector<2x16xf32>
    %191 = arith.select %189, %190, %187 : vector<2x16xi1>, vector<2x16xf32>
    %cst_55 = arith.constant dense<0xFF800000> : vector<2xf32>
    %192 = vector.multi_reduction <maximumf>, %191, %cst_55 [1] : vector<2x16xf32> to vector<2xf32>
    %193 = vector.shape_cast %192 : vector<2xf32> to vector<2x1xf32>
    %194 = vector.broadcast %193 : vector<2x1xf32> to vector<2x16xf32>
    %195 = arith.subf %191, %194 : vector<2x16xf32>
    %196 = math.exp %195 : vector<2x16xf32>
    %cst_56 = arith.constant dense<0.000000e+00> : vector<2xf32>
    %197 = vector.multi_reduction <add>, %196, %cst_56 [1] : vector<2x16xf32> to vector<2xf32>
    %198 = vector.shape_cast %197 : vector<2xf32> to vector<2x1xf32>
    %199 = tpu.reciprocal %198 {approx = true} : vector<2x1xf32> -> vector<2x1xf32>
    %200 = vector.broadcast %199 : vector<2x1xf32> to vector<2x16xf32>
    %201 = arith.mulf %196, %200 : vector<2x16xf32>
    %202 = vector.shape_cast %201 : vector<2x16xf32> to vector<2x16x1xf32>
    %203 = vector.broadcast %202 : vector<2x16x1xf32> to vector<2x16x32xf32>
    %204 = arith.mulf %203, %179 : vector<2x16x32xf32>
    %cst_57 = arith.constant dense<0.000000e+00> : vector<2x32xf32>
    %205 = vector.multi_reduction <add>, %204, %cst_57 [1] : vector<2x16x32xf32> to vector<2x32xf32>
    %206 = vector.extract_strided_slice %0 {offsets = [1, 0, 0, 0], sizes = [1, 2, 16, 32], strides = [1, 1, 1, 1]} : vector<3x2x16x32xf32> to vector<1x2x16x32xf32>
    %207 = vector.shape_cast %206 : vector<1x2x16x32xf32> to vector<2x16x32xf32>
    %208 = vector.extract_strided_slice %3 {offsets = [7, 0], sizes = [1, 32], strides = [1, 1]} : vector<16x192xf32> to vector<1x32xf32>
    %209 = vector.extract_strided_slice %177 {offsets = [0, 1], sizes = [1, 1], strides = [1, 1]} : vector<1x192xf32> to vector<1x1xf32>
    %210 = vector.shape_cast %208 : vector<1x32xf32> to vector<1x1x32xf32>
    %211 = vector.broadcast %210 : vector<1x1x32xf32> to vector<2x16x32xf32>
    %212 = arith.mulf %207, %211 : vector<2x16x32xf32>
    %cst_58 = arith.constant dense<0.000000e+00> : vector<2x16xf32>
    %213 = vector.multi_reduction <add>, %212, %cst_58 [2] : vector<2x16x32xf32> to vector<2x16xf32>
    %214 = vector.broadcast %209 : vector<1x1xf32> to vector<2x16xf32>
    %215 = arith.addf %213, %214 : vector<2x16xf32>
    %cst_59 = arith.constant dense<0xFF800000> : vector<2xf32>
    %216 = vector.multi_reduction <maximumf>, %215, %cst_59 [1] : vector<2x16xf32> to vector<2xf32>
    %217 = vector.shape_cast %216 : vector<2xf32> to vector<2x1xf32>
    %218 = vector.broadcast %217 : vector<2x1xf32> to vector<2x16xf32>
    %219 = arith.subf %215, %218 : vector<2x16xf32>
    %220 = math.exp %219 : vector<2x16xf32>
    %cst_60 = arith.constant dense<0.000000e+00> : vector<2xf32>
    %221 = vector.multi_reduction <add>, %220, %cst_60 [1] : vector<2x16xf32> to vector<2xf32>
    %222 = vector.shape_cast %221 : vector<2xf32> to vector<2x1xf32>
    %223 = tpu.reciprocal %222 {approx = true} : vector<2x1xf32> -> vector<2x1xf32>
    %224 = vector.broadcast %223 : vector<2x1xf32> to vector<2x16xf32>
    %225 = arith.mulf %220, %224 : vector<2x16xf32>
    %226 = vector.shape_cast %225 : vector<2x16xf32> to vector<2x16x1xf32>
    %227 = vector.broadcast %226 : vector<2x16x1xf32> to vector<2x16x32xf32>
    %228 = arith.mulf %227, %207 : vector<2x16x32xf32>
    %cst_61 = arith.constant dense<0.000000e+00> : vector<2x32xf32>
    %229 = vector.multi_reduction <add>, %228, %cst_61 [1] : vector<2x16x32xf32> to vector<2x32xf32>
    %230 = vector.extract_strided_slice %0 {offsets = [2, 0, 0, 0], sizes = [1, 2, 16, 32], strides = [1, 1, 1, 1]} : vector<3x2x16x32xf32> to vector<1x2x16x32xf32>
    %231 = vector.shape_cast %230 : vector<1x2x16x32xf32> to vector<2x16x32xf32>
    %232 = vector.extract_strided_slice %3 {offsets = [8, 0], sizes = [1, 32], strides = [1, 1]} : vector<16x192xf32> to vector<1x32xf32>
    %233 = vector.extract_strided_slice %177 {offsets = [0, 2], sizes = [1, 1], strides = [1, 1]} : vector<1x192xf32> to vector<1x1xf32>
    %234 = vector.shape_cast %232 : vector<1x32xf32> to vector<1x1x32xf32>
    %235 = vector.broadcast %234 : vector<1x1x32xf32> to vector<2x16x32xf32>
    %236 = arith.mulf %231, %235 : vector<2x16x32xf32>
    %cst_62 = arith.constant dense<0.000000e+00> : vector<2x16xf32>
    %237 = vector.multi_reduction <add>, %236, %cst_62 [2] : vector<2x16x32xf32> to vector<2x16xf32>
    %238 = vector.broadcast %233 : vector<1x1xf32> to vector<2x16xf32>
    %239 = arith.addf %237, %238 : vector<2x16xf32>
    %cst_63 = arith.constant dense<0xFF800000> : vector<2xf32>
    %240 = vector.multi_reduction <maximumf>, %239, %cst_63 [1] : vector<2x16xf32> to vector<2xf32>
    %241 = vector.shape_cast %240 : vector<2xf32> to vector<2x1xf32>
    %242 = vector.broadcast %241 : vector<2x1xf32> to vector<2x16xf32>
    %243 = arith.subf %239, %242 : vector<2x16xf32>
    %244 = math.exp %243 : vector<2x16xf32>
    %cst_64 = arith.constant dense<0.000000e+00> : vector<2xf32>
    %245 = vector.multi_reduction <add>, %244, %cst_64 [1] : vector<2x16xf32> to vector<2xf32>
    %246 = vector.shape_cast %245 : vector<2xf32> to vector<2x1xf32>
    %247 = tpu.reciprocal %246 {approx = true} : vector<2x1xf32> -> vector<2x1xf32>
    %248 = vector.broadcast %247 : vector<2x1xf32> to vector<2x16xf32>
    %249 = arith.mulf %244, %248 : vector<2x16xf32>
    %250 = vector.shape_cast %249 : vector<2x16xf32> to vector<2x16x1xf32>
    %251 = vector.broadcast %250 : vector<2x16x1xf32> to vector<2x16x32xf32>
    %252 = arith.mulf %251, %231 : vector<2x16x32xf32>
    %cst_65 = arith.constant dense<0.000000e+00> : vector<2x32xf32>
    %253 = vector.multi_reduction <add>, %252, %cst_65 [1] : vector<2x16x32xf32> to vector<2x32xf32>
    %254 = tpu.concatenate %175, %176, %229, %253 in 1 : vector<2x32xf32>, vector<2x32xf32>, vector<2x32xf32>, vector<2x32xf32> -> vector<2x128xf32>
    %c0_66 = arith.constant 0 : index
    %c0_67 = arith.constant 0 : index
    %255 = vector.load %arg4[%c0_66, %c0_67] : memref<128x192xf32, #tpu.memory_space<vmem>>, vector<128x192xf32>
    %cst_68 = arith.constant dense<0.000000e+00> : vector<2x192xf32>
    %256 = tpu.matmul %254, %255, %cst_68 {dimension_numbers = #tpu.dot_dimension_numbers<[1], [0], [0], [1], [0, 0, 1, 1], [], []>} : vector<2x128xf32>, vector<128x192xf32>, vector<2x192xf32> -> vector<2x192xf32>
    %257 = vector.extract_strided_slice %3 {offsets = [4, 0], sizes = [1, 192], strides = [1, 1]} : vector<16x192xf32> to vector<1x192xf32>
    %258 = vector.broadcast %257 : vector<1x192xf32> to vector<2x192xf32>
    %259 = arith.addf %256, %258 : vector<2x192xf32>
    %cst_69 = arith.constant 0.000000e+00 : f32
    %260 = vector.broadcast %cst_69 : f32 to vector<2x192xf32>
    %261 = arith.maximumf %259, %260 : vector<2x192xf32>
    %c0_70 = arith.constant 0 : index
    %c0_71 = arith.constant 0 : index
    %262 = vector.load %arg5[%c0_70, %c0_71] : memref<192x136xf32, #tpu.memory_space<vmem>>, vector<192x136xf32>
    %cst_72 = arith.constant dense<0.000000e+00> : vector<2x136xf32>
    %263 = tpu.matmul %261, %262, %cst_72 {dimension_numbers = #tpu.dot_dimension_numbers<[1], [0], [0], [1], [0, 0, 1, 1], [], []>} : vector<2x192xf32>, vector<192x136xf32>, vector<2x136xf32> -> vector<2x136xf32>
    %264 = vector.extract_strided_slice %3 {offsets = [5, 0], sizes = [1, 136], strides = [1, 1]} : vector<16x192xf32> to vector<1x136xf32>
    %265 = vector.broadcast %264 : vector<1x136xf32> to vector<2x136xf32>
    %266 = arith.addf %263, %265 : vector<2x136xf32>
    %267 = vector.extract_strided_slice %266 {offsets = [0, 0], sizes = [2, 64], strides = [1, 1]} : vector<2x136xf32> to vector<2x64xf32>
    %cst_73 = arith.constant 0.000000e+00 : f32
    %268 = vector.broadcast %cst_73 : f32 to vector<2x64xf32>
    %269 = arith.maximumf %267, %268 : vector<2x64xf32>
    %270 = vector.extract_strided_slice %266 {offsets = [0, 64], sizes = [2, 64], strides = [1, 1]} : vector<2x136xf32> to vector<2x64xf32>
    %cst_74 = arith.constant 0.000000e+00 : f32
    %271 = vector.broadcast %cst_74 : f32 to vector<2x64xf32>
    %272 = arith.maximumf %270, %271 : vector<2x64xf32>
    %273 = vector.extract_strided_slice %266 {offsets = [0, 128], sizes = [2, 2], strides = [1, 1]} : vector<2x136xf32> to vector<2x2xf32>
    %cst_75 = arith.constant 0.000000e+00 : f32
    %274 = vector.broadcast %cst_75 : f32 to vector<2x2xf32>
    %275 = arith.subf %274, %273 : vector<2x2xf32>
    %276 = math.exp %275 : vector<2x2xf32>
    %cst_76 = arith.constant 1.000000e+00 : f32
    %277 = vector.broadcast %cst_76 : f32 to vector<2x2xf32>
    %278 = arith.addf %277, %276 : vector<2x2xf32>
    %279 = tpu.reciprocal %278 {approx = true} : vector<2x2xf32> -> vector<2x2xf32>
    %280 = vector.extract_strided_slice %266 {offsets = [0, 130], sizes = [2, 6], strides = [1, 1]} : vector<2x136xf32> to vector<2x6xf32>
    %281 = vector.extract_strided_slice %3 {offsets = [10, 0], sizes = [1, 64], strides = [1, 1]} : vector<16x192xf32> to vector<1x64xf32>
    %282 = vector.broadcast %281 : vector<1x64xf32> to vector<2x64xf32>
    %283 = arith.mulf %269, %282 : vector<2x64xf32>
    %cst_77 = arith.constant dense<0.000000e+00> : vector<2xf32>
    %284 = vector.multi_reduction <add>, %283, %cst_77 [1] : vector<2x64xf32> to vector<2xf32>
    %285 = vector.shape_cast %284 : vector<2xf32> to vector<2x1xf32>
    %286 = vector.extract_strided_slice %177 {offsets = [0, 4], sizes = [1, 1], strides = [1, 1]} : vector<1x192xf32> to vector<1x1xf32>
    %287 = vector.broadcast %286 : vector<1x1xf32> to vector<2x1xf32>
    %288 = arith.addf %285, %287 : vector<2x1xf32>
    %cst_78 = arith.constant 0.000000e+00 : f32
    %289 = vector.broadcast %cst_78 : f32 to vector<2x1xf32>
    %290 = arith.subf %289, %288 : vector<2x1xf32>
    %291 = math.exp %290 : vector<2x1xf32>
    %cst_79 = arith.constant 1.000000e+00 : f32
    %292 = vector.broadcast %cst_79 : f32 to vector<2x1xf32>
    %293 = arith.addf %292, %291 : vector<2x1xf32>
    %294 = tpu.reciprocal %293 {approx = true} : vector<2x1xf32> -> vector<2x1xf32>
    %295 = vector.extract_strided_slice %3 {offsets = [11, 0], sizes = [1, 64], strides = [1, 1]} : vector<16x192xf32> to vector<1x64xf32>
    %296 = vector.broadcast %295 : vector<1x64xf32> to vector<2x64xf32>
    %297 = arith.mulf %272, %296 : vector<2x64xf32>
    %cst_80 = arith.constant dense<0.000000e+00> : vector<2xf32>
    %298 = vector.multi_reduction <add>, %297, %cst_80 [1] : vector<2x64xf32> to vector<2xf32>
    %299 = vector.shape_cast %298 : vector<2xf32> to vector<2x1xf32>
    %300 = vector.extract_strided_slice %177 {offsets = [0, 5], sizes = [1, 1], strides = [1, 1]} : vector<1x192xf32> to vector<1x1xf32>
    %301 = vector.broadcast %300 : vector<1x1xf32> to vector<2x1xf32>
    %302 = arith.addf %299, %301 : vector<2x1xf32>
    %cst_81 = arith.constant 0.000000e+00 : f32
    %303 = vector.broadcast %cst_81 : f32 to vector<2x1xf32>
    %304 = arith.subf %303, %302 : vector<2x1xf32>
    %305 = math.exp %304 : vector<2x1xf32>
    %cst_82 = arith.constant 1.000000e+00 : f32
    %306 = vector.broadcast %cst_82 : f32 to vector<2x1xf32>
    %307 = arith.addf %306, %305 : vector<2x1xf32>
    %308 = tpu.reciprocal %307 {approx = true} : vector<2x1xf32> -> vector<2x1xf32>
    %309 = vector.broadcast %294 : vector<2x1xf32> to vector<2x32xf32>
    %310 = arith.mulf %309, %173 : vector<2x32xf32>
    %311 = vector.broadcast %308 : vector<2x1xf32> to vector<2x32xf32>
    %312 = arith.mulf %311, %174 : vector<2x32xf32>
    %313 = vector.extract_strided_slice %3 {offsets = [9, 0], sizes = [1, 32], strides = [1, 1]} : vector<16x192xf32> to vector<1x32xf32>
    %314 = vector.extract_strided_slice %177 {offsets = [0, 3], sizes = [1, 1], strides = [1, 1]} : vector<1x192xf32> to vector<1x1xf32>
    %315 = vector.broadcast %313 : vector<1x32xf32> to vector<2x32xf32>
    %316 = arith.mulf %205, %315 : vector<2x32xf32>
    %cst_83 = arith.constant dense<0.000000e+00> : vector<2xf32>
    %317 = vector.multi_reduction <add>, %316, %cst_83 [1] : vector<2x32xf32> to vector<2xf32>
    %318 = vector.shape_cast %317 : vector<2xf32> to vector<2x1xf32>
    %319 = vector.broadcast %314 : vector<1x1xf32> to vector<2x1xf32>
    %320 = arith.addf %318, %319 : vector<2x1xf32>
    %321 = vector.broadcast %313 : vector<1x32xf32> to vector<2x32xf32>
    %322 = arith.mulf %310, %321 : vector<2x32xf32>
    %cst_84 = arith.constant dense<0.000000e+00> : vector<2xf32>
    %323 = vector.multi_reduction <add>, %322, %cst_84 [1] : vector<2x32xf32> to vector<2xf32>
    %324 = vector.shape_cast %323 : vector<2xf32> to vector<2x1xf32>
    %325 = vector.broadcast %314 : vector<1x1xf32> to vector<2x1xf32>
    %326 = arith.addf %324, %325 : vector<2x1xf32>
    %327 = vector.broadcast %313 : vector<1x32xf32> to vector<2x32xf32>
    %328 = arith.mulf %312, %327 : vector<2x32xf32>
    %cst_85 = arith.constant dense<0.000000e+00> : vector<2xf32>
    %329 = vector.multi_reduction <add>, %328, %cst_85 [1] : vector<2x32xf32> to vector<2xf32>
    %330 = vector.shape_cast %329 : vector<2xf32> to vector<2x1xf32>
    %331 = vector.broadcast %314 : vector<1x1xf32> to vector<2x1xf32>
    %332 = arith.addf %330, %331 : vector<2x1xf32>
    %333 = arith.maximumf %320, %326 : vector<2x1xf32>
    %334 = arith.maximumf %333, %332 : vector<2x1xf32>
    %335 = arith.subf %320, %334 : vector<2x1xf32>
    %336 = math.exp %335 : vector<2x1xf32>
    %337 = arith.subf %326, %334 : vector<2x1xf32>
    %338 = math.exp %337 : vector<2x1xf32>
    %339 = arith.subf %332, %334 : vector<2x1xf32>
    %340 = math.exp %339 : vector<2x1xf32>
    %341 = arith.addf %336, %338 : vector<2x1xf32>
    %342 = arith.addf %341, %340 : vector<2x1xf32>
    %343 = tpu.reciprocal %342 {approx = true} : vector<2x1xf32> -> vector<2x1xf32>
    %344 = vector.broadcast %336 : vector<2x1xf32> to vector<2x32xf32>
    %345 = arith.mulf %344, %205 : vector<2x32xf32>
    %346 = vector.broadcast %338 : vector<2x1xf32> to vector<2x32xf32>
    %347 = arith.mulf %346, %310 : vector<2x32xf32>
    %348 = arith.addf %345, %347 : vector<2x32xf32>
    %349 = vector.broadcast %340 : vector<2x1xf32> to vector<2x32xf32>
    %350 = arith.mulf %349, %312 : vector<2x32xf32>
    %351 = arith.addf %348, %350 : vector<2x32xf32>
    %352 = vector.broadcast %343 : vector<2x1xf32> to vector<2x32xf32>
    %353 = arith.mulf %351, %352 : vector<2x32xf32>
    %c0_86 = arith.constant 0 : index
    %c0_87 = arith.constant 0 : index
    %354 = vector.load %arg6[%c0_86, %c0_87] : memref<32x32xf32, #tpu.memory_space<vmem>>, vector<32x32xf32>
    %cst_88 = arith.constant dense<0.000000e+00> : vector<2x32xf32>
    %355 = tpu.matmul %353, %354, %cst_88 {dimension_numbers = #tpu.dot_dimension_numbers<[1], [0], [0], [1], [0, 0, 1, 1], [], []>} : vector<2x32xf32>, vector<32x32xf32>, vector<2x32xf32> -> vector<2x32xf32>
    %356 = vector.extract_strided_slice %3 {offsets = [12, 0], sizes = [1, 32], strides = [1, 1]} : vector<16x192xf32> to vector<1x32xf32>
    %357 = vector.broadcast %356 : vector<1x32xf32> to vector<2x32xf32>
    %358 = arith.addf %355, %357 : vector<2x32xf32>
    %cst_89 = arith.constant 0.000000e+00 : f32
    %359 = vector.broadcast %cst_89 : f32 to vector<2x32xf32>
    %360 = arith.maximumf %358, %359 : vector<2x32xf32>
    %361 = vector.extract_strided_slice %3 {offsets = [13, 0], sizes = [1, 32], strides = [1, 1]} : vector<16x192xf32> to vector<1x32xf32>
    %362 = vector.broadcast %361 : vector<1x32xf32> to vector<2x32xf32>
    %363 = arith.mulf %360, %362 : vector<2x32xf32>
    %cst_90 = arith.constant dense<0.000000e+00> : vector<2xf32>
    %364 = vector.multi_reduction <add>, %363, %cst_90 [1] : vector<2x32xf32> to vector<2xf32>
    %365 = vector.shape_cast %364 : vector<2xf32> to vector<2x1xf32>
    %366 = vector.extract_strided_slice %177 {offsets = [0, 6], sizes = [1, 1], strides = [1, 1]} : vector<1x192xf32> to vector<1x1xf32>
    %367 = vector.broadcast %366 : vector<1x1xf32> to vector<2x1xf32>
    %368 = arith.addf %365, %367 : vector<2x1xf32>
    %cst_91 = arith.constant 0.000000e+00 : f32
    %369 = vector.broadcast %cst_91 : f32 to vector<2x1xf32>
    %370 = arith.subf %369, %368 : vector<2x1xf32>
    %371 = math.exp %370 : vector<2x1xf32>
    %cst_92 = arith.constant 1.000000e+00 : f32
    %372 = vector.broadcast %cst_92 : f32 to vector<2x1xf32>
    %373 = arith.addf %372, %371 : vector<2x1xf32>
    %374 = tpu.reciprocal %373 {approx = true} : vector<2x1xf32> -> vector<2x1xf32>
    %cst_93 = arith.constant 0.000000e+00 : f32
    %375 = vector.broadcast %cst_93 : f32 to vector<2x117xf32>
    %376 = tpu.concatenate %353, %205, %310, %312, %374, %279, %294, %308, %280, %375 in 1 : vector<2x32xf32>, vector<2x32xf32>, vector<2x32xf32>, vector<2x32xf32>, vector<2x1xf32>, vector<2x2xf32>, vector<2x1xf32>, vector<2x1xf32>, vector<2x6xf32>, vector<2x117xf32> -> vector<2x256xf32>
    %c0_94 = arith.constant 0 : index
    %c0_95 = arith.constant 0 : index
    %377 = vector.load %arg8[%c0_94, %c0_95] : memref<2x256xf32, #tpu.memory_space<vmem>>, vector<2x256xf32>
    tpu.vector_store %arg8[%c0_94, %c0_95], %376 {strides = array<i32>} : memref<2x256xf32, #tpu.memory_space<vmem>>, vector<2x256xf32>,
    return
  }
}

</mosaic_0001>

<llo_original>
// kernel: arg_forward.1
$region0: #{arg_forward.1}
  #allocation0 [shape = 'u32[]', space=smem, size = 0x4, offset = 0x4, fixed_abs, tag = 'smem constant byte address 0x4 - core index']
  #allocation1 [shape = 'u32[72,128]{1,0:T(1,128)}', space=vmem, size = 0x9000, scoped, tag = 'internal scratch']
  %s0 = inlined_call_operand.vmem [shape: f32[3,2,16,32], index: 0, kind: input, shape index: {}]
  %s1 = inlined_call_operand.vmem [shape: f32[3,2,16], index: 1, kind: input, shape index: {}]
  %s2 = inlined_call_operand.vmem [shape: f32[3,32,192], index: 2, kind: input, shape index: {}]
  %s3 = inlined_call_operand.vmem [shape: f32[128,128], index: 3, kind: input, shape index: {}]
  %s4 = inlined_call_operand.vmem [shape: f32[128,192], index: 4, kind: input, shape index: {}]
  %s5 = inlined_call_operand.vmem [shape: f32[192,136], index: 5, kind: input, shape index: {}]
  %s6 = inlined_call_operand.vmem [shape: f32[32,32], index: 6, kind: input, shape index: {}]
  %s7 = inlined_call_operand.vmem [shape: f32[16,192], index: 7, kind: input, shape index: {}]
  %s8 = inlined_call_operand.vmem [shape: f32[2,256], index: 8, kind: output, shape index: {}]
  %s9 = sld [smem:[#allocation0]]
  $region42: #{arg_forward.1} parent=0
    _
  %s11 = ssub.s32 1, %s9
  %s12 = scalar_select 0, %s11, %s9
  // Predicated region
  $region2: #{arg_forward.1} parent=0 // pred_check
    _
  $region3: #{arg_forward.1} parent=0 // pred_check_branch
    %14 = sbr.rel (0) target = $region5
  $region4: #{arg_forward.1} parent=0 // pred_region
    _
  $region5: #{arg_forward.1} parent=0 // pred_fallthru
    _
  // Predicated region
  $region6: #{arg_forward.1} parent=0 // pred_check
    _
  $region7: #{arg_forward.1} parent=0 // pred_check_branch
    %16 = sbr.rel (0) target = $region9
  $region8: #{arg_forward.1} parent=0 // pred_region
    _
  $region9: #{arg_forward.1} parent=0 // pred_fallthru
    _
  // Predicated region
  $region10: #{arg_forward.1} parent=0 // pred_check
    _
  $region11: #{arg_forward.1} parent=0 // pred_check_branch
    %18 = sbr.rel (0) target = $region13
  $region12: #{arg_forward.1} parent=0 // pred_region
    _
  $region13: #{arg_forward.1} parent=0 // pred_fallthru
    _
  // Predicated region
  $region14: #{arg_forward.1} parent=0 // pred_check
    _
  $region15: #{arg_forward.1} parent=0 // pred_check_branch
    %20 = sbr.rel (0) target = $region17
  $region16: #{arg_forward.1} parent=0 // pred_region
    _
  $region17: #{arg_forward.1} parent=0 // pred_fallthru
    _
  // Predicated region
  $region18: #{arg_forward.1} parent=0 // pred_check
    _
  $region19: #{arg_forward.1} parent=0 // pred_check_branch
    %22 = sbr.rel (0) target = $region21
  $region20: #{arg_forward.1} parent=0 // pred_region
    _
  $region21: #{arg_forward.1} parent=0 // pred_fallthru
    _
  // Predicated region
  $region22: #{arg_forward.1} parent=0 // pred_check
    _
  $region23: #{arg_forward.1} parent=0 // pred_check_branch
    %24 = sbr.rel (0) target = $region25
  $region24: #{arg_forward.1} parent=0 // pred_region
    _
  $region25: #{arg_forward.1} parent=0 // pred_fallthru
    _
  // Predicated region
  $region26: #{arg_forward.1} parent=0 // pred_check
    _
  $region27: #{arg_forward.1} parent=0 // pred_check_branch
    %26 = sbr.rel (0) target = $region29
  $region28: #{arg_forward.1} parent=0 // pred_region
    _
  $region29: #{arg_forward.1} parent=0 // pred_fallthru
    _
  // Predicated region
  $region30: #{arg_forward.1} parent=0 // pred_check
    _
  $region31: #{arg_forward.1} parent=0 // pred_check_branch
    %28 = sbr.rel (0) target = $region33
  $region32: #{arg_forward.1} parent=0 // pred_region
    _
  $region33: #{arg_forward.1} parent=0 // pred_fallthru
    _
  %v29 = vld [vmem:[%s0] sm:$0xff]
  %v30 = vld [vmem:[%s0 + $0x8] sm:$0xff]
  %v31 = vld [vmem:[%s0 + $0x10] sm:$0xff]
  %v32 = vld [vmem:[%s0 + $0x18] sm:$0xff]
  %v33 = vld [vmem:[%s0 + $0x20] sm:$0xff]
  %v34 = vld [vmem:[%s0 + $0x28] sm:$0xff]
  %v35 = vld [vmem:[%s0 + $0x30] sm:$0xff]
  %v36 = vld [vmem:[%s0 + $0x38] sm:$0xff]
  %v37 = vld [vmem:[%s0 + $0x40] sm:$0xff]
  %v38 = vld [vmem:[%s0 + $0x48] sm:$0xff]
  %v39 = vld [vmem:[%s0 + $0x50] sm:$0xff]
  %v40 = vld [vmem:[%s0 + $0x58] sm:$0xff]
  %v41 = vld [vmem:[%s1] sm:$0x3]
  %v42 = vld [vmem:[%s1 + $0x2] sm:$0x3]
  %v43 = vld [vmem:[%s1 + $0x4] sm:$0x3]
  %v44 = vld [vmem:[%s2] sm:$0xff]
  %v45 = vld [vmem:[%s2 + $0x8] sm:$0xff]
  %v46 = vld [vmem:[%s2 + $0x10] sm:$0xff]
  %v47 = vld [vmem:[%s2 + $0x18] sm:$0xff]
  %v48 = vld [vmem:[%s2 + $0x20] sm:$0xff]
  %v49 = vld [vmem:[%s2 + $0x28] sm:$0xff]
  %v50 = vld [vmem:[%s2 + $0x30] sm:$0xff]
  %v51 = vld [vmem:[%s2 + $0x38] sm:$0xff]
  %v52 = vld [vmem:[%s2 + $0x40] sm:$0xff]
  %v53 = vld [vmem:[%s2 + $0x50] sm:$0xff]
  %v54 = vld [vmem:[%s2 + $0x60] sm:$0xff]
  %v55 = vld [vmem:[%s2 + $0x70] sm:$0xff]
  %v56 = vld [vmem:[%s2 + $0x80] sm:$0xff]
  %v57 = vld [vmem:[%s2 + $0x90] sm:$0xff]
  %v58 = vld [vmem:[%s2 + $0xa0] sm:$0xff]
  %v59 = vld [vmem:[%s2 + $0xb0] sm:$0xff]
  %v60 = vld [vmem:[%s7] sm:$0xff]
  %v61 = vld [vmem:[%s7 + $0x8] sm:$0xff]
  %v62 = vld [vmem:[%s7 + $0x10] sm:$0xff]
  %v63 = vperm.slane %v60, 0
  %v64 = vperm.slane %v61, 0
  %vm65 = vcmask 261120
  %v67 = vsel %vm65, %v29, 0
  %v70 = vsel %vm65, %v30, 0
  %v73 = vsel %vm65, %v31, 0
  %v76 = vsel %vm65, %v32, 0
  %78 = vmatpush.msra.mxu0 0.0
  %79 = vmatpush.msra.mxu0 0.0
  %80 = vmatpush.msra.mxu0 0.0
  %81 = vmatpush.msra.mxu0 0.0
  %82 = vmatpush.msra.mxu0 0.0
  %83 = vmatpush.msra.mxu0 0.0
  %84 = vmatpush.msra.mxu0 0.0
  %85 = vmatpush.msra.mxu0 0.0
  %86 = vmatpush.msra.mxu0 0.0
  %87 = vmatpush.msra.mxu0 0.0
  %88 = vmatpush.msra.mxu0 0.0
  %89 = vmatpush.msra.mxu0 0.0
  %90 = vmatpush.msra.mxu0 %v50
  %91 = vmatpush.msra.mxu0 %v48
  %92 = vmatpush.msra.mxu0 %v46
  %93 = vmatpush.msra.mxu0 %v44
  %94 = vmatmul.f32.gmra.mxu0 %v67
  %v95 = vpop.f32.mrf.mxu0
  %v96 = vadd.f32 %v63, %v95
  %97 = vmatmul.f32.gmra.mxu0 %v70
  %v98 = vpop.f32.mrf.mxu0
  %v99 = vadd.f32 %v63, %v98
  %100 = vmatmul.f32.gmra.mxu0 %v73
  %v101 = vpop.f32.mrf.mxu0
  %v102 = vadd.f32 %v63, %v101
  %103 = vmatmul.f32.gmra.mxu0 %v76
  %v104 = vpop.f32.mrf.mxu0
  %v105 = vadd.f32 %v63, %v104
  %106 = vdwg.mxu0
  %107 = vmatpush.msra.mxu0 0.0
  %108 = vmatpush.msra.mxu0 0.0
  %109 = vmatpush.msra.mxu0 0.0
  %110 = vmatpush.msra.mxu0 0.0
  %111 = vmatpush.msra.mxu0 0.0
  %112 = vmatpush.msra.mxu0 0.0
  %113 = vmatpush.msra.mxu0 0.0
  %114 = vmatpush.msra.mxu0 0.0
  %115 = vmatpush.msra.mxu0 0.0
  %116 = vmatpush.msra.mxu0 0.0
  %117 = vmatpush.msra.mxu0 0.0
  %118 = vmatpush.msra.mxu0 0.0
  %119 = vmatpush.msra.mxu0 %v51
  %120 = vmatpush.msra.mxu0 %v49
  %121 = vmatpush.msra.mxu0 %v47
  %122 = vmatpush.msra.mxu0 %v45
  %123 = vmatmul.f32.gmra.mxu0 %v67
  %v124 = vpop.f32.mrf.mxu0
  %v125 = vadd.f32 %v64, %v124
  %126 = vmatmul.f32.gmra.mxu0 %v70
  %v127 = vpop.f32.mrf.mxu0
  %v128 = vadd.f32 %v64, %v127
  %129 = vmatmul.f32.gmra.mxu0 %v73
  %v130 = vpop.f32.mrf.mxu0
  %v131 = vadd.f32 %v64, %v130
  %132 = vmatmul.f32.gmra.mxu0 %v76
  %v133 = vpop.f32.mrf.mxu0
  %v134 = vadd.f32 %v64, %v133
  %135 = vdwg.mxu0
  %v136 = vperm.slane %v60, 1
  %v138 = vsel %vm65, %v33, 0
  %v141 = vsel %vm65, %v34, 0
  %v144 = vsel %vm65, %v35, 0
  %v147 = vsel %vm65, %v36, 0
  %149 = vmatpush.msra.mxu0 0.0
  %150 = vmatpush.msra.mxu0 0.0
  %151 = vmatpush.msra.mxu0 0.0
  %152 = vmatpush.msra.mxu0 0.0
  %153 = vmatpush.msra.mxu0 0.0
  %154 = vmatpush.msra.mxu0 0.0
  %155 = vmatpush.msra.mxu0 0.0
  %156 = vmatpush.msra.mxu0 0.0
  %157 = vmatpush.msra.mxu0 0.0
  %158 = vmatpush.msra.mxu0 0.0
  %159 = vmatpush.msra.mxu0 0.0
  %160 = vmatpush.msra.mxu0 0.0
  %161 = vmatpush.msra.mxu0 %v55
  %162 = vmatpush.msra.mxu0 %v54
  %163 = vmatpush.msra.mxu0 %v53
  %164 = vmatpush.msra.mxu0 %v52
  %165 = vmatmul.f32.gmra.mxu0 %v138
  %v166 = vpop.f32.mrf.mxu0
  %v167 = vadd.f32 %v136, %v166
  %168 = vmatmul.f32.gmra.mxu0 %v141
  %v169 = vpop.f32.mrf.mxu0
  %v170 = vadd.f32 %v136, %v169
  %171 = vmatmul.f32.gmra.mxu0 %v144
  %v172 = vpop.f32.mrf.mxu0
  %v173 = vadd.f32 %v136, %v172
  %174 = vmatmul.f32.gmra.mxu0 %v147
  %v175 = vpop.f32.mrf.mxu0
  %v176 = vadd.f32 %v136, %v175
  %177 = vdwg.mxu0
  %v178 = vperm.slane %v60, 2
  %v180 = vsel %vm65, %v37, 0
  %v183 = vsel %vm65, %v38, 0
  %v186 = vsel %vm65, %v39, 0
  %v189 = vsel %vm65, %v40, 0
  %191 = vmatpush.msra.mxu0 0.0
  %192 = vmatpush.msra.mxu0 0.0
  %193 = vmatpush.msra.mxu0 0.0
  %194 = vmatpush.msra.mxu0 0.0
  %195 = vmatpush.msra.mxu0 0.0
  %196 = vmatpush.msra.mxu0 0.0
  %197 = vmatpush.msra.mxu0 0.0
  %198 = vmatpush.msra.mxu0 0.0
  %199 = vmatpush.msra.mxu0 0.0
  %200 = vmatpush.msra.mxu0 0.0
  %201 = vmatpush.msra.mxu0 0.0
  %202 = vmatpush.msra.mxu0 0.0
  %203 = vmatpush.msra.mxu0 %v59
  %204 = vmatpush.msra.mxu0 %v58
  %205 = vmatpush.msra.mxu0 %v57
  %206 = vmatpush.msra.mxu0 %v56
  %207 = vmatmul.f32.gmra.mxu0 %v180
  %v208 = vpop.f32.mrf.mxu0
  %v209 = vadd.f32 %v178, %v208
  %210 = vmatmul.f32.gmra.mxu0 %v183
  %v211 = vpop.f32.mrf.mxu0
  %v212 = vadd.f32 %v178, %v211
  %213 = vmatmul.f32.gmra.mxu0 %v186
  %v214 = vpop.f32.mrf.mxu0
  %v215 = vadd.f32 %v178, %v214
  %216 = vmatmul.f32.gmra.mxu0 %v189
  %v217 = vpop.f32.mrf.mxu0
  %v218 = vadd.f32 %v178, %v217
  %219 = vdwg.mxu0
  %v221 = vsel %vm65, %v167, 0
  %v224 = vsel %vm65, %v170, 0
  %v227 = vsel %vm65, %v96, 0
  %v230 = vsel %vm65, %v99, 0
  %232 = vmatpush.xpose.msra.mxu0 0.0
  %233 = vmatpush.xpose.msra.mxu0 0.0
  %234 = vmatpush.xpose.msra.mxu0 0.0
  %235 = vmatpush.xpose.msra.mxu0 0.0
  %236 = vmatpush.xpose.msra.mxu0 0.0
  %237 = vmatpush.xpose.msra.mxu0 0.0
  %238 = vmatpush.xpose.msra.mxu0 0.0
  %239 = vmatpush.xpose.msra.mxu0 0.0
  %240 = vmatpush.xpose.msra.mxu0 0.0
  %241 = vmatpush.xpose.msra.mxu0 0.0
  %242 = vmatpush.xpose.msra.mxu0 0.0
  %243 = vmatpush.xpose.msra.mxu0 0.0
  %244 = vmatpush.xpose.msra.mxu0 0.0
  %245 = vmatpush.xpose.msra.mxu0 0.0
  %246 = vmatpush.xpose.msra.mxu0 %v230
  %247 = vmatpush.xpose.msra.mxu0 %v227
  %248 = vmatmul.f32.gmra.mxu0 %v221
  %v249 = vpop.f32.mrf.mxu0
  %v250 = vadd.f32 0.0, %v249
  %251 = vmatmul.f32.gmra.mxu0 %v224
  %v252 = vpop.f32.mrf.mxu0
  %v253 = vadd.f32 0.0, %v252
  %254 = vdwg.mxu0
  %v256 = vsel %vm65, %v173, 0
  %v259 = vsel %vm65, %v176, 0
  %v262 = vsel %vm65, %v102, 0
  %v265 = vsel %vm65, %v105, 0
  %267 = vmatpush.xpose.msra.mxu0 0.0
  %268 = vmatpush.xpose.msra.mxu0 0.0
  %269 = vmatpush.xpose.msra.mxu0 0.0
  %270 = vmatpush.xpose.msra.mxu0 0.0
  %271 = vmatpush.xpose.msra.mxu0 0.0
  %272 = vmatpush.xpose.msra.mxu0 0.0
  %273 = vmatpush.xpose.msra.mxu0 0.0
  %274 = vmatpush.xpose.msra.mxu0 0.0
  %275 = vmatpush.xpose.msra.mxu0 0.0
  %276 = vmatpush.xpose.msra.mxu0 0.0
  %277 = vmatpush.xpose.msra.mxu0 0.0
  %278 = vmatpush.xpose.msra.mxu0 0.0
  %279 = vmatpush.xpose.msra.mxu0 0.0
  %280 = vmatpush.xpose.msra.mxu0 0.0
  %281 = vmatpush.xpose.msra.mxu0 %v265
  %282 = vmatpush.xpose.msra.mxu0 %v262
  %283 = vmatmul.f32.gmra.mxu0 %v256
  %v284 = vpop.f32.mrf.mxu0
  %v285 = vadd.f32 0.0, %v284
  %286 = vmatmul.f32.gmra.mxu0 %v259
  %v287 = vpop.f32.mrf.mxu0
  %v288 = vadd.f32 0.0, %v287
  %289 = vdwg.mxu0
  %v290 = vmul.f32 %v250, 0.17677669
  %v291 = vmul.f32 %v253, 0.17677669
  %v292 = vmul.f32 %v285, 0.17677669
  %v293 = vmul.f32 %v288, 0.17677669
  %v295 = vrot.slane %v41, 1
  %vm297 = vcmp.eq.f32.partialorder %v41, 0.0
  %vm298 = vcmp.eq.f32.partialorder %v295, 0.0
  %v299 = vsel %vm297, 1, 0
  %v300 = vsel %vm298, 1, 0
  %v301 = vperm.slane %v299, 0
  %v302 = vperm.slane %v300, 0
  %vm303 = vcmp.eq.s32.totalorder %v301, 1
  %vm304 = vcmp.eq.s32.totalorder %v302, 1
  %v305 = vsel %vm303, -1e+09, %v290
  %v306 = vsel %vm303, -1e+09, %v291
  %v307 = vsel %vm304, -1e+09, %v292
  %v308 = vsel %vm304, -1e+09, %v293
  %vm309 = vcmask 130048
  %v310 = vsel %vm309, %v305, -inf
  %311 = vmax.xlane.f32.xlu0 %v310
  %v312 = vpop.xlane.xlu0 %311
  %v313 = vsel %vm309, %v306, -inf
  %314 = vmax.xlane.f32.xlu0 %v313
  %v315 = vpop.xlane.xlu0 %314
  %v316 = vsel %vm309, %v307, -inf
  %317 = vmax.xlane.f32.xlu0 %v316
  %v318 = vpop.xlane.xlu0 %317
  %v319 = vsel %vm309, %v308, -inf
  %320 = vmax.xlane.f32.xlu0 %v319
  %v321 = vpop.xlane.xlu0 %320
  %v322 = vsub.f32 %v305, %v312
  %v323 = vsub.f32 %v306, %v315
  %v324 = vsub.f32 %v307, %v318
  %v325 = vsub.f32 %v308, %v321
  %v326 = vmul.f32 %v322, 1.442695
  %v327 = vpow.pop %v326
  %v328 = vmul.f32 %v323, 1.442695
  %v329 = vpow.pop %v328
  %v330 = vmul.f32 %v324, 1.442695
  %v331 = vpow.pop %v330
  %v332 = vmul.f32 %v325, 1.442695
  %v333 = vpow.pop %v332
  %v334 = vsel %vm309, %v327, 0.0
  %335 = vadd.xlane.f32.xlu0 %v334
  %v336 = vpop.xlane.xlu0 %335
  %v337 = vsel %vm309, %v329, 0.0
  %338 = vadd.xlane.f32.xlu0 %v337
  %v339 = vpop.xlane.xlu0 %338
  %v340 = vsel %vm309, %v331, 0.0
  %341 = vadd.xlane.f32.xlu0 %v340
  %v342 = vpop.xlane.xlu0 %341
  %v343 = vsel %vm309, %v333, 0.0
  %344 = vadd.xlane.f32.xlu0 %v343
  %v345 = vpop.xlane.xlu0 %344
  %v346 = vrcp.pop %v336
  %v347 = vrcp.pop %v339
  %v348 = vrcp.pop %v342
  %v349 = vrcp.pop %v345
  %v350 = vmul.f32 %v327, %v346
  %v351 = vmul.f32 %v329, %v347
  %v352 = vmul.f32 %v331, %v348
  %v353 = vmul.f32 %v333, %v349
  %v354 = vsel %vm309, %v350, 0.0
  %v355 = vsel %vm309, %v351, 0.0
  %v356 = vadd.f32 %v354, %v355
  %v357 = vrot.slane %v356, 4
  %v358 = vadd.f32 %v356, %v357
  %v359 = vrot.slane %v358, 2
  %v360 = vadd.f32 %v358, %v359
  %v361 = vrot.slane %v360, 1
  %v362 = vadd.f32 %v360, %v361
  %v363 = vsel %vm309, %v352, 0.0
  %v364 = vsel %vm309, %v353, 0.0
  %v365 = vadd.f32 %v363, %v364
  %v366 = vrot.slane %v365, 4
  %v367 = vadd.f32 %v365, %v366
  %v368 = vrot.slane %v367, 2
  %v369 = vadd.f32 %v367, %v368
  %v370 = vrot.slane %v369, 1
  %v371 = vadd.f32 %v369, %v370
  %v372 = vrcp.pop 16.0
  %v373 = vmul.f32 16.0, %v372
  %v374 = vsub.f32 1.0, %v373
  %v375 = vmul.f32 %v372, %v374
  %v376 = vadd.f32 %v372, %v375
  %vm377 = vweird.f32 %v372
  %v378 = vsel %vm377, %v372, %v376
  %v379 = vmul.f32 %v362, %v378
  %v380 = vmul.f32 %v371, %v378
  %v381 = vlaneseq
  %v382 = vshrl.u32 %v381, 7
  %384 = vset.pattern.permute.xlu0 %v382
  %385 = vperm.xlu0 %384, %v379
  %v386 = vpop.permute.xlu0 %385
  %v387 = vlaneseq
  %v388 = vshrl.u32 %v387, 7
  %v389 = vadd.s32 %v388, 8
  %390 = vset.pattern.permute.xlu0 %v389
  %391 = vperm.xlu0 %390, %v379
  %v392 = vpop.permute.xlu0 %391
  %v393 = vlaneseq
  %v394 = vshrl.u32 %v393, 7
  %396 = vset.pattern.permute.xlu0 %v394
  %397 = vperm.xlu0 %396, %v380
  %v398 = vpop.permute.xlu0 %397
  %v399 = vlaneseq
  %v400 = vshrl.u32 %v399, 7
  %v401 = vadd.s32 %v400, 8
  %402 = vset.pattern.permute.xlu0 %v401
  %403 = vperm.xlu0 %402, %v380
  %v404 = vpop.permute.xlu0 %403
  %v405 = vmul.f32 %v386, %v96
  %v406 = vmul.f32 %v392, %v99
  %v407 = vmul.f32 %v398, %v102
  %v408 = vmul.f32 %v404, %v105
  %vm409 = vcmask 523520
  %v410 = vsel %vm409, %v405, 0.0
  %v411 = vsel %vm409, %v406, 0.0
  %v412 = vadd.f32 %v410, %v411
  %v413 = vrot.slane %v412, 4
  %v414 = vadd.f32 %v412, %v413
  %v415 = vrot.slane %v414, 2
  %v416 = vadd.f32 %v414, %v415
  %v417 = vrot.slane %v416, 1
  %v418 = vadd.f32 %v416, %v417
  %v419 = vsel %vm409, %v407, 0.0
  %v420 = vsel %vm409, %v408, 0.0
  %v421 = vadd.f32 %v419, %v420
  %v422 = vrot.slane %v421, 4
  %v423 = vadd.f32 %v421, %v422
  %v424 = vrot.slane %v423, 2
  %v425 = vadd.f32 %v423, %v424
  %v426 = vrot.slane %v425, 1
  %v427 = vadd.f32 %v425, %v426
  %428 = vrot.lane.b32.xlu0 %v96, 64
  %v429 = vpop.permute.xlu0 %428
  %430 = vrot.lane.b32.xlu0 %v99, 64
  %v431 = vpop.permute.xlu0 %430
  %v433 = vsel %vm65, %v209, 0
  %v436 = vsel %vm65, %v212, 0
  %v438 = vsel %vm65, %v429, 0
  %v440 = vsel %vm65, %v431, 0
  %442 = vmatpush.xpose.msra.mxu0 0.0
  %443 = vmatpush.xpose.msra.mxu0 0.0
  %444 = vmatpush.xpose.msra.mxu0 0.0
  %445 = vmatpush.xpose.msra.mxu0 0.0
  %446 = vmatpush.xpose.msra.mxu0 0.0
  %447 = vmatpush.xpose.msra.mxu0 0.0
  %448 = vmatpush.xpose.msra.mxu0 0.0
  %449 = vmatpush.xpose.msra.mxu0 0.0
  %450 = vmatpush.xpose.msra.mxu0 0.0
  %451 = vmatpush.xpose.msra.mxu0 0.0
  %452 = vmatpush.xpose.msra.mxu0 0.0
  %453 = vmatpush.xpose.msra.mxu0 0.0
  %454 = vmatpush.xpose.msra.mxu0 0.0
  %455 = vmatpush.xpose.msra.mxu0 0.0
  %456 = vmatpush.xpose.msra.mxu0 %v440
  %457 = vmatpush.xpose.msra.mxu0 %v438
  %458 = vmatmul.f32.gmra.mxu0 %v433
  %v459 = vpop.f32.mrf.mxu0
  %v460 = vadd.f32 0.0, %v459
  %461 = vmatmul.f32.gmra.mxu0 %v436
  %v462 = vpop.f32.mrf.mxu0
  %v463 = vadd.f32 0.0, %v462
  %464 = vdwg.mxu0
  %465 = vrot.lane.b32.xlu0 %v102, 64
  %v466 = vpop.permute.xlu0 %465
  %467 = vrot.lane.b32.xlu0 %v105, 64
  %v468 = vpop.permute.xlu0 %467
  %v470 = vsel %vm65, %v215, 0
  %v473 = vsel %vm65, %v218, 0
  %v475 = vsel %vm65, %v466, 0
  %v477 = vsel %vm65, %v468, 0
  %479 = vmatpush.xpose.msra.mxu0 0.0
  %480 = vmatpush.xpose.msra.mxu0 0.0
  %481 = vmatpush.xpose.msra.mxu0 0.0
  %482 = vmatpush.xpose.msra.mxu0 0.0
  %483 = vmatpush.xpose.msra.mxu0 0.0
  %484 = vmatpush.xpose.msra.mxu0 0.0
  %485 = vmatpush.xpose.msra.mxu0 0.0
  %486 = vmatpush.xpose.msra.mxu0 0.0
  %487 = vmatpush.xpose.msra.mxu0 0.0
  %488 = vmatpush.xpose.msra.mxu0 0.0
  %489 = vmatpush.xpose.msra.mxu0 0.0
  %490 = vmatpush.xpose.msra.mxu0 0.0
  %491 = vmatpush.xpose.msra.mxu0 0.0
  %492 = vmatpush.xpose.msra.mxu0 0.0
  %493 = vmatpush.xpose.msra.mxu0 %v477
  %494 = vmatpush.xpose.msra.mxu0 %v475
  %495 = vmatmul.f32.gmra.mxu0 %v470
  %v496 = vpop.f32.mrf.mxu0
  %v497 = vadd.f32 0.0, %v496
  %498 = vmatmul.f32.gmra.mxu0 %v473
  %v499 = vpop.f32.mrf.mxu0
  %v500 = vadd.f32 0.0, %v499
  %501 = vdwg.mxu0
  %v502 = vmul.f32 %v460, 0.17677669
  %v503 = vmul.f32 %v463, 0.17677669
  %v504 = vmul.f32 %v497, 0.17677669
  %v505 = vmul.f32 %v500, 0.17677669
  %v506 = vsel %vm303, -1e+09, %v502
  %v507 = vsel %vm303, -1e+09, %v503
  %v508 = vsel %vm304, -1e+09, %v504
  %v509 = vsel %vm304, -1e+09, %v505
  %v510 = vsel %vm309, %v506, -inf
  %511 = vmax.xlane.f32.xlu0 %v510
  %v512 = vpop.xlane.xlu0 %511
  %v513 = vsel %vm309, %v507, -inf
  %514 = vmax.xlane.f32.xlu0 %v513
  %v515 = vpop.xlane.xlu0 %514
  %v516 = vsel %vm309, %v508, -inf
  %517 = vmax.xlane.f32.xlu0 %v516
  %v518 = vpop.xlane.xlu0 %517
  %v519 = vsel %vm309, %v509, -inf
  %520 = vmax.xlane.f32.xlu0 %v519
  %v521 = vpop.xlane.xlu0 %520
  %v522 = vsub.f32 %v506, %v512
  %v523 = vsub.f32 %v507, %v515
  %v524 = vsub.f32 %v508, %v518
  %v525 = vsub.f32 %v509, %v521
  %v526 = vmul.f32 %v522, 1.442695
  %v527 = vpow.pop %v526
  %v528 = vmul.f32 %v523, 1.442695
  %v529 = vpow.pop %v528
  %v530 = vmul.f32 %v524, 1.442695
  %v531 = vpow.pop %v530
  %v532 = vmul.f32 %v525, 1.442695
  %v533 = vpow.pop %v532
  %v534 = vsel %vm309, %v527, 0.0
  %535 = vadd.xlane.f32.xlu0 %v534
  %v536 = vpop.xlane.xlu0 %535
  %v537 = vsel %vm309, %v529, 0.0
  %538 = vadd.xlane.f32.xlu0 %v537
  %v539 = vpop.xlane.xlu0 %538
  %v540 = vsel %vm309, %v531, 0.0
  %541 = vadd.xlane.f32.xlu0 %v540
  %v542 = vpop.xlane.xlu0 %541
  %v543 = vsel %vm309, %v533, 0.0
  %544 = vadd.xlane.f32.xlu0 %v543
  %v545 = vpop.xlane.xlu0 %544
  %v546 = vrcp.pop %v536
  %v547 = vrcp.pop %v539
  %v548 = vrcp.pop %v542
  %v549 = vrcp.pop %v545
  %v550 = vmul.f32 %v527, %v546
  %v551 = vmul.f32 %v529, %v547
  %v552 = vmul.f32 %v531, %v548
  %v553 = vmul.f32 %v533, %v549
  %v554 = vsel %vm309, %v550, 0.0
  %v555 = vsel %vm309, %v551, 0.0
  %v556 = vadd.f32 %v554, %v555
  %v557 = vrot.slane %v556, 4
  %v558 = vadd.f32 %v556, %v557
  %v559 = vrot.slane %v558, 2
  %v560 = vadd.f32 %v558, %v559
  %v561 = vrot.slane %v560, 1
  %v562 = vadd.f32 %v560, %v561
  %v563 = vsel %vm309, %v552, 0.0
  %v564 = vsel %vm309, %v553, 0.0
  %v565 = vadd.f32 %v563, %v564
  %v566 = vrot.slane %v565, 4
  %v567 = vadd.f32 %v565, %v566
  %v568 = vrot.slane %v567, 2
  %v569 = vadd.f32 %v567, %v568
  %v570 = vrot.slane %v569, 1
  %v571 = vadd.f32 %v569, %v570
  %v572 = vmul.f32 %v562, %v378
  %v573 = vmul.f32 %v571, %v378
  %v574 = vlaneseq
  %v575 = vshrl.u32 %v574, 7
  %577 = vset.pattern.permute.xlu0 %v575
  %578 = vperm.xlu0 %577, %v572
  %v579 = vpop.permute.xlu0 %578
  %v580 = vlaneseq
  %v581 = vshrl.u32 %v580, 7
  %v582 = vadd.s32 %v581, 8
  %583 = vset.pattern.permute.xlu0 %v582
  %584 = vperm.xlu0 %583, %v572
  %v585 = vpop.permute.xlu0 %584
  %v586 = vlaneseq
  %v587 = vshrl.u32 %v586, 7
  %589 = vset.pattern.permute.xlu0 %v587
  %590 = vperm.xlu0 %589, %v573
  %v591 = vpop.permute.xlu0 %590
  %v592 = vlaneseq
  %v593 = vshrl.u32 %v592, 7
  %v594 = vadd.s32 %v593, 8
  %595 = vset.pattern.permute.xlu0 %v594
  %596 = vperm.xlu0 %595, %v573
  %v597 = vpop.permute.xlu0 %596
  %v598 = vmul.f32 %v579, %v96
  %v599 = vmul.f32 %v585, %v99
  %v600 = vmul.f32 %v591, %v102
  %v601 = vmul.f32 %v597, %v105
  %vm602 = vcmask 1048320
  %v603 = vsel %vm602, %v598, 0.0
  %v604 = vsel %vm602, %v599, 0.0
  %v605 = vadd.f32 %v603, %v604
  %v606 = vrot.slane %v605, 4
  %v607 = vadd.f32 %v605, %v606
  %v608 = vrot.slane %v607, 2
  %v609 = vadd.f32 %v607, %v608
  %v610 = vrot.slane %v609, 1
  %v611 = vadd.f32 %v609, %v610
  %v612 = vsel %vm602, %v600, 0.0
  %v613 = vsel %vm602, %v601, 0.0
  %v614 = vadd.f32 %v612, %v613
  %v615 = vrot.slane %v614, 4
  %v616 = vadd.f32 %v614, %v615
  %v617 = vrot.slane %v616, 2
  %v618 = vadd.f32 %v616, %v617
  %v619 = vrot.slane %v618, 1
  %v620 = vadd.f32 %v618, %v619
  %621 = vrot.lane.b32.xlu0 %v167, 96
  %v622 = vpop.permute.xlu0 %621
  %623 = vrot.lane.b32.xlu0 %v170, 96
  %v624 = vpop.permute.xlu0 %623
  %v626 = vsel %vm65, %v125, 0
  %v629 = vsel %vm65, %v128, 0
  %v631 = vsel %vm65, %v622, 0
  %v633 = vsel %vm65, %v624, 0
  %635 = vmatpush.xpose.msra.mxu0 0.0
  %636 = vmatpush.xpose.msra.mxu0 0.0
  %637 = vmatpush.xpose.msra.mxu0 0.0
  %638 = vmatpush.xpose.msra.mxu0 0.0
  %639 = vmatpush.xpose.msra.mxu0 0.0
  %640 = vmatpush.xpose.msra.mxu0 0.0
  %641 = vmatpush.xpose.msra.mxu0 0.0
  %642 = vmatpush.xpose.msra.mxu0 0.0
  %643 = vmatpush.xpose.msra.mxu0 0.0
  %644 = vmatpush.xpose.msra.mxu0 0.0
  %645 = vmatpush.xpose.msra.mxu0 0.0
  %646 = vmatpush.xpose.msra.mxu0 0.0
  %647 = vmatpush.xpose.msra.mxu0 0.0
  %648 = vmatpush.xpose.msra.mxu0 0.0
  %649 = vmatpush.xpose.msra.mxu0 %v633
  %650 = vmatpush.xpose.msra.mxu0 %v631
  %651 = vmatmul.f32.gmra.mxu0 %v626
  %v652 = vpop.f32.mrf.mxu0
  %v653 = vadd.f32 0.0, %v652
  %654 = vmatmul.f32.gmra.mxu0 %v629
  %v655 = vpop.f32.mrf.mxu0
  %v656 = vadd.f32 0.0, %v655
  %657 = vdwg.mxu0
  %658 = vrot.lane.b32.xlu0 %v173, 96
  %v659 = vpop.permute.xlu0 %658
  %660 = vrot.lane.b32.xlu0 %v176, 96
  %v661 = vpop.permute.xlu0 %660
  %v663 = vsel %vm65, %v131, 0
  %v666 = vsel %vm65, %v134, 0
  %v668 = vsel %vm65, %v659, 0
  %v670 = vsel %vm65, %v661, 0
  %672 = vmatpush.xpose.msra.mxu0 0.0
  %673 = vmatpush.xpose.msra.mxu0 0.0
  %674 = vmatpush.xpose.msra.mxu0 0.0
  %675 = vmatpush.xpose.msra.mxu0 0.0
  %676 = vmatpush.xpose.msra.mxu0 0.0
  %677 = vmatpush.xpose.msra.mxu0 0.0
  %678 = vmatpush.xpose.msra.mxu0 0.0
  %679 = vmatpush.xpose.msra.mxu0 0.0
  %680 = vmatpush.xpose.msra.mxu0 0.0
  %681 = vmatpush.xpose.msra.mxu0 0.0
  %682 = vmatpush.xpose.msra.mxu0 0.0
  %683 = vmatpush.xpose.msra.mxu0 0.0
  %684 = vmatpush.xpose.msra.mxu0 0.0
  %685 = vmatpush.xpose.msra.mxu0 0.0
  %686 = vmatpush.xpose.msra.mxu0 %v670
  %687 = vmatpush.xpose.msra.mxu0 %v668
  %688 = vmatmul.f32.gmra.mxu0 %v663
  %v689 = vpop.f32.mrf.mxu0
  %v690 = vadd.f32 0.0, %v689
  %691 = vmatmul.f32.gmra.mxu0 %v666
  %v692 = vpop.f32.mrf.mxu0
  %v693 = vadd.f32 0.0, %v692
  %694 = vdwg.mxu0
  %v695 = vmul.f32 %v653, 0.17677669
  %v696 = vmul.f32 %v656, 0.17677669
  %v697 = vmul.f32 %v690, 0.17677669
  %v698 = vmul.f32 %v693, 0.17677669
  %v700 = vrot.slane %v42, 1
  %vm702 = vcmp.eq.f32.partialorder %v42, 0.0
  %vm703 = vcmp.eq.f32.partialorder %v700, 0.0
  %v704 = vsel %vm702, 1, 0
  %v705 = vsel %vm703, 1, 0
  %v706 = vperm.slane %v704, 0
  %v707 = vperm.slane %v705, 0
  %vm708 = vcmp.eq.s32.totalorder %v706, 1
  %vm709 = vcmp.eq.s32.totalorder %v707, 1
  %v710 = vsel %vm708, -1e+09, %v695
  %v711 = vsel %vm708, -1e+09, %v696
  %v712 = vsel %vm709, -1e+09, %v697
  %v713 = vsel %vm709, -1e+09, %v698
  %v714 = vsel %vm309, %v710, -inf
  %715 = vmax.xlane.f32.xlu0 %v714
  %v716 = vpop.xlane.xlu0 %715
  %v717 = vsel %vm309, %v711, -inf
  %718 = vmax.xlane.f32.xlu0 %v717
  %v719 = vpop.xlane.xlu0 %718
  %v720 = vsel %vm309, %v712, -inf
  %721 = vmax.xlane.f32.xlu0 %v720
  %v722 = vpop.xlane.xlu0 %721
  %v723 = vsel %vm309, %v713, -inf
  %724 = vmax.xlane.f32.xlu0 %v723
  %v725 = vpop.xlane.xlu0 %724
  %v726 = vsub.f32 %v710, %v716
  %v727 = vsub.f32 %v711, %v719
  %v728 = vsub.f32 %v712, %v722
  %v729 = vsub.f32 %v713, %v725
  %v730 = vmul.f32 %v726, 1.442695
  %v731 = vpow.pop %v730
  %v732 = vmul.f32 %v727, 1.442695
  %v733 = vpow.pop %v732
  %v734 = vmul.f32 %v728, 1.442695
  %v735 = vpow.pop %v734
  %v736 = vmul.f32 %v729, 1.442695
  %v737 = vpow.pop %v736
  %v738 = vsel %vm309, %v731, 0.0
  %739 = vadd.xlane.f32.xlu0 %v738
  %v740 = vpop.xlane.xlu0 %739
  %v741 = vsel %vm309, %v733, 0.0
  %742 = vadd.xlane.f32.xlu0 %v741
  %v743 = vpop.xlane.xlu0 %742
  %v744 = vsel %vm309, %v735, 0.0
  %745 = vadd.xlane.f32.xlu0 %v744
  %v746 = vpop.xlane.xlu0 %745
  %v747 = vsel %vm309, %v737, 0.0
  %748 = vadd.xlane.f32.xlu0 %v747
  %v749 = vpop.xlane.xlu0 %748
  %v750 = vrcp.pop %v740
  %v751 = vrcp.pop %v743
  %v752 = vrcp.pop %v746
  %v753 = vrcp.pop %v749
  %v754 = vmul.f32 %v731, %v750
  %v755 = vmul.f32 %v733, %v751
  %v756 = vmul.f32 %v735, %v752
  %v757 = vmul.f32 %v737, %v753
  %v758 = vsel %vm309, %v754, 0.0
  %v759 = vsel %vm309, %v755, 0.0
  %v760 = vadd.f32 %v758, %v759
  %v761 = vrot.slane %v760, 4
  %v762 = vadd.f32 %v760, %v761
  %v763 = vrot.slane %v762, 2
  %v764 = vadd.f32 %v762, %v763
  %v765 = vrot.slane %v764, 1
  %v766 = vadd.f32 %v764, %v765
  %v767 = vsel %vm309, %v756, 0.0
  %v768 = vsel %vm309, %v757, 0.0
  %v769 = vadd.f32 %v767, %v768
  %v770 = vrot.slane %v769, 4
  %v771 = vadd.f32 %v769, %v770
  %v772 = vrot.slane %v771, 2
  %v773 = vadd.f32 %v771, %v772
  %v774 = vrot.slane %v773, 1
  %v775 = vadd.f32 %v773, %v774
  %v776 = vmul.f32 %v766, %v378
  %v777 = vmul.f32 %v775, %v378
  %v778 = vlaneseq
  %v779 = vshrl.u32 %v778, 7
  %781 = vset.pattern.permute.xlu0 %v779
  %782 = vperm.xlu0 %781, %v776
  %v783 = vpop.permute.xlu0 %782
  %v784 = vlaneseq
  %v785 = vshrl.u32 %v784, 7
  %v786 = vadd.s32 %v785, 8
  %787 = vset.pattern.permute.xlu0 %v786
  %788 = vperm.xlu0 %787, %v776
  %v789 = vpop.permute.xlu0 %788
  %v790 = vlaneseq
  %v791 = vshrl.u32 %v790, 7
  %793 = vset.pattern.permute.xlu0 %v791
  %794 = vperm.xlu0 %793, %v777
  %v795 = vpop.permute.xlu0 %794
  %v796 = vlaneseq
  %v797 = vshrl.u32 %v796, 7
  %v798 = vadd.s32 %v797, 8
  %799 = vset.pattern.permute.xlu0 %v798
  %800 = vperm.xlu0 %799, %v777
  %v801 = vpop.permute.xlu0 %800
  %v802 = vmul.f32 %v783, %v167
  %v803 = vmul.f32 %v789, %v170
  %v804 = vmul.f32 %v795, %v173
  %v805 = vmul.f32 %v801, %v176
  %vm806 = vcmask 785920
  %v807 = vsel %vm806, %v802, 0.0
  %v808 = vsel %vm806, %v803, 0.0
  %v809 = vadd.f32 %v807, %v808
  %v810 = vrot.slane %v809, 4
  %v811 = vadd.f32 %v809, %v810
  %v812 = vrot.slane %v811, 2
  %v813 = vadd.f32 %v811, %v812
  %v814 = vrot.slane %v813, 1
  %v815 = vadd.f32 %v813, %v814
  %v816 = vsel %vm806, %v804, 0.0
  %v817 = vsel %vm806, %v805, 0.0
  %v818 = vadd.f32 %v816, %v817
  %v819 = vrot.slane %v818, 4
  %v820 = vadd.f32 %v818, %v819
  %v821 = vrot.slane %v820, 2
  %v822 = vadd.f32 %v820, %v821
  %v823 = vrot.slane %v822, 1
  %v824 = vadd.f32 %v822, %v823
  %825 = vrot.lane.b32.xlu0 %v125, 96
  %v826 = vpop.permute.xlu0 %825
  %827 = vrot.lane.b32.xlu0 %v128, 96
  %v828 = vpop.permute.xlu0 %827
  %829 = vrot.lane.b32.xlu0 %v209, 96
  %v830 = vpop.permute.xlu0 %829
  %831 = vrot.lane.b32.xlu0 %v212, 96
  %v832 = vpop.permute.xlu0 %831
  %v833 = vsel %vm65, %v826, 0
  %v835 = vsel %vm65, %v828, 0
  %v837 = vsel %vm65, %v830, 0
  %v839 = vsel %vm65, %v832, 0
  %841 = vmatpush.xpose.msra.mxu0 0.0
  %842 = vmatpush.xpose.msra.mxu0 0.0
  %843 = vmatpush.xpose.msra.mxu0 0.0
  %844 = vmatpush.xpose.msra.mxu0 0.0
  %845 = vmatpush.xpose.msra.mxu0 0.0
  %846 = vmatpush.xpose.msra.mxu0 0.0
  %847 = vmatpush.xpose.msra.mxu0 0.0
  %848 = vmatpush.xpose.msra.mxu0 0.0
  %849 = vmatpush.xpose.msra.mxu0 0.0
  %850 = vmatpush.xpose.msra.mxu0 0.0
  %851 = vmatpush.xpose.msra.mxu0 0.0
  %852 = vmatpush.xpose.msra.mxu0 0.0
  %853 = vmatpush.xpose.msra.mxu0 0.0
  %854 = vmatpush.xpose.msra.mxu0 0.0
  %855 = vmatpush.xpose.msra.mxu0 %v839
  %856 = vmatpush.xpose.msra.mxu0 %v837
  %857 = vmatmul.f32.gmra.mxu0 %v833
  %v858 = vpop.f32.mrf.mxu0
  %v859 = vadd.f32 0.0, %v858
  %860 = vmatmul.f32.gmra.mxu0 %v835
  %v861 = vpop.f32.mrf.mxu0
  %v862 = vadd.f32 0.0, %v861
  %863 = vdwg.mxu0
  %864 = vrot.lane.b32.xlu0 %v131, 96
  %v865 = vpop.permute.xlu0 %864
  %866 = vrot.lane.b32.xlu0 %v134, 96
  %v867 = vpop.permute.xlu0 %866
  %868 = vrot.lane.b32.xlu0 %v215, 96
  %v869 = vpop.permute.xlu0 %868
  %870 = vrot.lane.b32.xlu0 %v218, 96
  %v871 = vpop.permute.xlu0 %870
  %v872 = vsel %vm65, %v865, 0
  %v874 = vsel %vm65, %v867, 0
  %v876 = vsel %vm65, %v869, 0
  %v878 = vsel %vm65, %v871, 0
  %880 = vmatpush.xpose.msra.mxu0 0.0
  %881 = vmatpush.xpose.msra.mxu0 0.0
  %882 = vmatpush.xpose.msra.mxu0 0.0
  %883 = vmatpush.xpose.msra.mxu0 0.0
  %884 = vmatpush.xpose.msra.mxu0 0.0
  %885 = vmatpush.xpose.msra.mxu0 0.0
  %886 = vmatpush.xpose.msra.mxu0 0.0
  %887 = vmatpush.xpose.msra.mxu0 0.0
  %888 = vmatpush.xpose.msra.mxu0 0.0
  %889 = vmatpush.xpose.msra.mxu0 0.0
  %890 = vmatpush.xpose.msra.mxu0 0.0
  %891 = vmatpush.xpose.msra.mxu0 0.0
  %892 = vmatpush.xpose.msra.mxu0 0.0
  %893 = vmatpush.xpose.msra.mxu0 0.0
  %894 = vmatpush.xpose.msra.mxu0 %v878
  %895 = vmatpush.xpose.msra.mxu0 %v876
  %896 = vmatmul.f32.gmra.mxu0 %v872
  %v897 = vpop.f32.mrf.mxu0
  %v898 = vadd.f32 0.0, %v897
  %899 = vmatmul.f32.gmra.mxu0 %v874
  %v900 = vpop.f32.mrf.mxu0
  %v901 = vadd.f32 0.0, %v900
  %902 = vdwg.mxu0
  %v903 = vmul.f32 %v859, 0.17677669
  %v904 = vmul.f32 %v862, 0.17677669
  %v905 = vmul.f32 %v898, 0.17677669
  %v906 = vmul.f32 %v901, 0.17677669
  %v908 = vrot.slane %v43, 1
  %vm910 = vcmp.eq.f32.partialorder %v43, 0.0
  %vm911 = vcmp.eq.f32.partialorder %v908, 0.0
  %v912 = vsel %vm910, 1, 0
  %v913 = vsel %vm911, 1, 0
  %v914 = vperm.slane %v912, 0
  %v915 = vperm.slane %v913, 0
  %vm916 = vcmp.eq.s32.totalorder %v914, 1
  %vm917 = vcmp.eq.s32.totalorder %v915, 1
  %v918 = vsel %vm916, -1e+09, %v903
  %v919 = vsel %vm916, -1e+09, %v904
  %v920 = vsel %vm917, -1e+09, %v905
  %v921 = vsel %vm917, -1e+09, %v906
  %v922 = vsel %vm309, %v918, -inf
  %923 = vmax.xlane.f32.xlu0 %v922
  %v924 = vpop.xlane.xlu0 %923
  %v925 = vsel %vm309, %v919, -inf
  %926 = vmax.xlane.f32.xlu0 %v925
  %v927 = vpop.xlane.xlu0 %926
  %v928 = vsel %vm309, %v920, -inf
  %929 = vmax.xlane.f32.xlu0 %v928
  %v930 = vpop.xlane.xlu0 %929
  %v931 = vsel %vm309, %v921, -inf
  %932 = vmax.xlane.f32.xlu0 %v931
  %v933 = vpop.xlane.xlu0 %932
  %v934 = vsub.f32 %v918, %v924
  %v935 = vsub.f32 %v919, %v927
  %v936 = vsub.f32 %v920, %v930
  %v937 = vsub.f32 %v921, %v933
  %v938 = vmul.f32 %v934, 1.442695
  %v939 = vpow.pop %v938
  %v940 = vmul.f32 %v935, 1.442695
  %v941 = vpow.pop %v940
  %v942 = vmul.f32 %v936, 1.442695
  %v943 = vpow.pop %v942
  %v944 = vmul.f32 %v937, 1.442695
  %v945 = vpow.pop %v944
  %v946 = vsel %vm309, %v939, 0.0
  %947 = vadd.xlane.f32.xlu0 %v946
  %v948 = vpop.xlane.xlu0 %947
  %v949 = vsel %vm309, %v941, 0.0
  %950 = vadd.xlane.f32.xlu0 %v949
  %v951 = vpop.xlane.xlu0 %950
  %v952 = vsel %vm309, %v943, 0.0
  %953 = vadd.xlane.f32.xlu0 %v952
  %v954 = vpop.xlane.xlu0 %953
  %v955 = vsel %vm309, %v945, 0.0
  %956 = vadd.xlane.f32.xlu0 %v955
  %v957 = vpop.xlane.xlu0 %956
  %v958 = vrcp.pop %v948
  %v959 = vrcp.pop %v951
  %v960 = vrcp.pop %v954
  %v961 = vrcp.pop %v957
  %v962 = vmul.f32 %v939, %v958
  %v963 = vmul.f32 %v941, %v959
  %v964 = vmul.f32 %v943, %v960
  %v965 = vmul.f32 %v945, %v961
  %v966 = vsel %vm309, %v962, 0.0
  %v967 = vsel %vm309, %v963, 0.0
  %v968 = vadd.f32 %v966, %v967
  %v969 = vrot.slane %v968, 4
  %v970 = vadd.f32 %v968, %v969
  %v971 = vrot.slane %v970, 2
  %v972 = vadd.f32 %v970, %v971
  %v973 = vrot.slane %v972, 1
  %v974 = vadd.f32 %v972, %v973
  %v975 = vsel %vm309, %v964, 0.0
  %v976 = vsel %vm309, %v965, 0.0
  %v977 = vadd.f32 %v975, %v976
  %v978 = vrot.slane %v977, 4
  %v979 = vadd.f32 %v977, %v978
  %v980 = vrot.slane %v979, 2
  %v981 = vadd.f32 %v979, %v980
  %v982 = vrot.slane %v981, 1
  %v983 = vadd.f32 %v981, %v982
  %v984 = vmul.f32 %v974, %v378
  %v985 = vmul.f32 %v983, %v378
  %v986 = vlaneseq
  %v987 = vshrl.u32 %v986, 7
  %989 = vset.pattern.permute.xlu0 %v987
  %990 = vperm.xlu0 %989, %v984
  %v991 = vpop.permute.xlu0 %990
  %v992 = vlaneseq
  %v993 = vshrl.u32 %v992, 7
  %v994 = vadd.s32 %v993, 8
  %995 = vset.pattern.permute.xlu0 %v994
  %996 = vperm.xlu0 %995, %v984
  %v997 = vpop.permute.xlu0 %996
  %v998 = vlaneseq
  %v999 = vshrl.u32 %v998, 7
  %1001 = vset.pattern.permute.xlu0 %v999
  %1002 = vperm.xlu0 %1001, %v985
  %v1003 = vpop.permute.xlu0 %1002
  %v1004 = vlaneseq
  %v1005 = vshrl.u32 %v1004, 7
  %v1006 = vadd.s32 %v1005, 8
  %1007 = vset.pattern.permute.xlu0 %v1006
  %1008 = vperm.xlu0 %1007, %v985
  %v1009 = vpop.permute.xlu0 %1008
  %v1010 = vmul.f32 %v991, %v209
  %v1011 = vmul.f32 %v997, %v212
  %v1012 = vmul.f32 %v1003, %v215
  %v1013 = vmul.f32 %v1009, %v218
  %v1014 = vsel %vm806, %v1010, 0.0
  %v1015 = vsel %vm806, %v1011, 0.0
  %v1016 = vadd.f32 %v1014, %v1015
  %v1017 = vrot.slane %v1016, 4
  %v1018 = vadd.f32 %v1016, %v1017
  %v1019 = vrot.slane %v1018, 2
  %v1020 = vadd.f32 %v1018, %v1019
  %v1021 = vrot.slane %v1020, 1
  %v1022 = vadd.f32 %v1020, %v1021
  %v1023 = vsel %vm806, %v1012, 0.0
  %v1024 = vsel %vm806, %v1013, 0.0
  %v1025 = vadd.f32 %v1023, %v1024
  %v1026 = vrot.slane %v1025, 4
  %v1027 = vadd.f32 %v1025, %v1026
  %v1028 = vrot.slane %v1027, 2
  %v1029 = vadd.f32 %v1027, %v1028
  %v1030 = vrot.slane %v1029, 1
  %v1031 = vadd.f32 %v1029, %v1030
  %vm1034 = vcmask 1041409
  %v1035 = vsel %vm1034, %v427, %v418
  %1036 = vrot.lane.b32.xlu0 %v1035, 96
  %v1037 = vpop.permute.xlu0 %1036
  %v1041 = vsel %vm1034, %v620, %v611
  %1042 = vrot.lane.b32.xlu0 %v1041, 64
  %v1043 = vpop.permute.xlu0 %1042
  %v1047 = vsel %vm1034, %v824, %v815
  %v1051 = vsel %vm1034, %v1031, %v1022
  %1052 = vrot.lane.b32.xlu0 %v1051, 32
  %v1053 = vpop.permute.xlu0 %1052
  %v1055 = vsel %vm65, %v1037, %v1043
  %vm1056 = vcmask 523264
  %v1057 = vsel %vm1056, %v1055, %v1047
  %vm1058 = vcmask 785408
  %v1059 = vsel %vm1058, %v1057, %v1053
  %v1060 = vld [vmem:[%s3] sm:$0xff]
  %v1061 = vld [vmem:[%s3 + $0x8] sm:$0xff]
  %v1062 = vld [vmem:[%s3 + $0x10] sm:$0xff]
  %v1063 = vld [vmem:[%s3 + $0x18] sm:$0xff]
  %v1064 = vld [vmem:[%s3 + $0x20] sm:$0xff]
  %v1065 = vld [vmem:[%s3 + $0x28] sm:$0xff]
  %v1066 = vld [vmem:[%s3 + $0x30] sm:$0xff]
  %v1067 = vld [vmem:[%s3 + $0x38] sm:$0xff]
  %v1068 = vld [vmem:[%s3 + $0x40] sm:$0xff]
  %v1069 = vld [vmem:[%s3 + $0x48] sm:$0xff]
  %v1070 = vld [vmem:[%s3 + $0x50] sm:$0xff]
  %v1071 = vld [vmem:[%s3 + $0x58] sm:$0xff]
  %v1072 = vld [vmem:[%s3 + $0x60] sm:$0xff]
  %v1073 = vld [vmem:[%s3 + $0x68] sm:$0xff]
  %v1074 = vld [vmem:[%s3 + $0x70] sm:$0xff]
  %v1075 = vld [vmem:[%s3 + $0x78] sm:$0xff]
  %v1076 = vperm.slane %v60, 3
  %1077 = vmatpush.msra.mxu0 %v1075
  %1078 = vmatpush.msra.mxu0 %v1074
  %1079 = vmatpush.msra.mxu0 %v1073
  %1080 = vmatpush.msra.mxu0 %v1072
  %1081 = vmatpush.msra.mxu0 %v1071
  %1082 = vmatpush.msra.mxu0 %v1070
  %1083 = vmatpush.msra.mxu0 %v1069
  %1084 = vmatpush.msra.mxu0 %v1068
  %1085 = vmatpush.msra.mxu0 %v1067
  %1086 = vmatpush.msra.mxu0 %v1066
  %1087 = vmatpush.msra.mxu0 %v1065
  %1088 = vmatpush.msra.mxu0 %v1064
  %1089 = vmatpush.msra.mxu0 %v1063
  %1090 = vmatpush.msra.mxu0 %v1062
  %1091 = vmatpush.msra.mxu0 %v1061
  %1092 = vmatpush.msra.mxu0 %v1060
  %1093 = vmatmul.f32.gmra.mxu0 %v1059
  %v1094 = vpop.f32.mrf.mxu0
  %v1095 = vadd.f32 %v1076, %v1094
  %1096 = vdwg.mxu0
  %v1097 = vperm.slane %v60, 6
  %v1098 = vmul.f32 %v29, %v1097
  %v1099 = vmul.f32 %v30, %v1097
  %v1100 = vmul.f32 %v31, %v1097
  %v1101 = vmul.f32 %v32, %v1097
  %v1102 = vsel %vm65, %v1098, 0.0
  %1103 = vadd.xlane.f32.xlu0 %v1102
  %v1104 = vpop.xlane.xlu0 %1103
  %v1105 = vsel %vm65, %v1099, 0.0
  %1106 = vadd.xlane.f32.xlu0 %v1105
  %v1107 = vpop.xlane.xlu0 %1106
  %v1108 = vsel %vm65, %v1100, 0.0
  %1109 = vadd.xlane.f32.xlu0 %v1108
  %v1110 = vpop.xlane.xlu0 %1109
  %v1111 = vsel %vm65, %v1101, 0.0
  %1112 = vadd.xlane.f32.xlu0 %v1111
  %v1113 = vpop.xlane.xlu0 %1112
  %v1115 = vrot.slane %v62, 6
  %s1116 = vtos %v1115
  %v1117 = vstv %s1116
  %v1119 = vadd.f32 %v1104, %v1117
  %v1120 = vadd.f32 %v1107, %v1117
  %v1121 = vadd.f32 %v1110, %v1117
  %v1122 = vadd.f32 %v1113, %v1117
  %v1127 = vlaneseq
  %v1128 = vand.u32 %v1127, 127
  %v1129 = vperm.slane %v1119, %v1128
  %v1130 = vadd.s32 %v1128, 4294967288
  %v1131 = vperm.slane %v1120, %v1130
  %vm1132 = vcmask 130112
  %v1133 = vsel %vm1132, %v1131, %v1129
  %v1134 = vperm.slane %v1121, %v1128
  %v1135 = vperm.slane %v1122, %v1130
  %v1136 = vsel %vm1132, %v1135, %v1134
  %v1137 = vsel %vm1034, %v1136, %v1133
  %v1139 = vsel %vm297, -1e+30, %v1137
  %vm1140 = vcmask 123904
  %v1141 = vsel %vm1140, %v1139, -inf
  %1142 = vmax.xlane.f32.xlu0 %v1141
  %v1143 = vpop.xlane.xlu0 %1142
  %v1144 = vsub.f32 %v1139, %v1143
  %v1145 = vmul.f32 %v1144, 1.442695
  %v1146 = vpow.pop %v1145
  %v1147 = vsel %vm1140, %v1146, 0.0
  %1148 = vadd.xlane.f32.xlu0 %v1147
  %v1149 = vpop.xlane.xlu0 %1148
  %v1150 = vrcp.pop %v1149
  %v1151 = vmul.f32 %v1146, %v1150
  %v1152 = vperm.slane %v1151, 0
  %v1153 = vlaneseq
  %v1154 = vshrl.u32 %v1153, 7
  %1156 = vset.pattern.permute.xlu0 %v1154
  %1157 = vperm.xlu0 %1156, %v1152
  %v1158 = vpop.permute.xlu0 %1157
  %v1159 = vlaneseq
  %v1160 = vshrl.u32 %v1159, 7
  %v1161 = vadd.s32 %v1160, 8
  %1162 = vset.pattern.permute.xlu0 %v1161
  %1163 = vperm.xlu0 %1162, %v1152
  %v1164 = vpop.permute.xlu0 %1163
  %v1165 = vperm.slane %v1151, 1
  %v1166 = vlaneseq
  %v1167 = vshrl.u32 %v1166, 7
  %1169 = vset.pattern.permute.xlu0 %v1167
  %1170 = vperm.xlu0 %1169, %v1165
  %v1171 = vpop.permute.xlu0 %1170
  %v1172 = vlaneseq
  %v1173 = vshrl.u32 %v1172, 7
  %v1174 = vadd.s32 %v1173, 8
  %1175 = vset.pattern.permute.xlu0 %v1174
  %1176 = vperm.xlu0 %1175, %v1165
  %v1177 = vpop.permute.xlu0 %1176
  %v1178 = vmul.f32 %v1158, %v29
  %v1179 = vmul.f32 %v1164, %v30
  %v1180 = vmul.f32 %v1171, %v31
  %v1181 = vmul.f32 %v1177, %v32
  %v1182 = vsel %vm65, %v1178, 0.0
  %v1183 = vsel %vm65, %v1179, 0.0
  %v1184 = vadd.f32 %v1182, %v1183
  %v1185 = vrot.slane %v1184, 4
  %v1186 = vadd.f32 %v1184, %v1185
  %v1187 = vrot.slane %v1186, 2
  %v1188 = vadd.f32 %v1186, %v1187
  %v1189 = vrot.slane %v1188, 1
  %v1190 = vadd.f32 %v1188, %v1189
  %v1191 = vsel %vm65, %v1180, 0.0
  %v1192 = vsel %vm65, %v1181, 0.0
  %v1193 = vadd.f32 %v1191, %v1192
  %v1194 = vrot.slane %v1193, 4
  %v1195 = vadd.f32 %v1193, %v1194
  %v1196 = vrot.slane %v1195, 2
  %v1197 = vadd.f32 %v1195, %v1196
  %v1198 = vrot.slane %v1197, 1
  %v1199 = vadd.f32 %v1197, %v1198
  %v1200 = vperm.slane %v60, 7
  %v1201 = vmul.f32 %v33, %v1200
  %v1202 = vmul.f32 %v34, %v1200
  %v1203 = vmul.f32 %v35, %v1200
  %v1204 = vmul.f32 %v36, %v1200
  %v1205 = vsel %vm65, %v1201, 0.0
  %1206 = vadd.xlane.f32.xlu0 %v1205
  %v1207 = vpop.xlane.xlu0 %1206
  %v1208 = vsel %vm65, %v1202, 0.0
  %1209 = vadd.xlane.f32.xlu0 %v1208
  %v1210 = vpop.xlane.xlu0 %1209
  %v1211 = vsel %vm65, %v1203, 0.0
  %1212 = vadd.xlane.f32.xlu0 %v1211
  %v1213 = vpop.xlane.xlu0 %1212
  %v1214 = vsel %vm65, %v1204, 0.0
  %1215 = vadd.xlane.f32.xlu0 %v1214
  %v1216 = vpop.xlane.xlu0 %1215
  %1217 = vrot.lane.b32.xlu0 %v1115, 127
  %v1218 = vpop.permute.xlu0 %1217
  %s1219 = vtos %v1218
  %v1220 = vstv %s1219
  %v1222 = vadd.f32 %v1207, %v1220
  %v1223 = vadd.f32 %v1210, %v1220
  %v1224 = vadd.f32 %v1213, %v1220
  %v1225 = vadd.f32 %v1216, %v1220
  %v1230 = vperm.slane %v1222, %v1128
  %v1231 = vperm.slane %v1223, %v1130
  %v1232 = vsel %vm1132, %v1231, %v1230
  %v1233 = vperm.slane %v1224, %v1128
  %v1234 = vperm.slane %v1225, %v1130
  %v1235 = vsel %vm1132, %v1234, %v1233
  %v1236 = vsel %vm1034, %v1235, %v1232
  %v1238 = vsel %vm1140, %v1236, -inf
  %1239 = vmax.xlane.f32.xlu0 %v1238
  %v1240 = vpop.xlane.xlu0 %1239
  %v1242 = vperm.slane %v1240, 0
  %v1243 = vperm.slane %v1240, 1
  %v1246 = vsub.f32 %v1222, %v1242
  %v1247 = vsub.f32 %v1223, %v1242
  %v1248 = vsub.f32 %v1224, %v1243
  %v1249 = vsub.f32 %v1225, %v1243
  %v1250 = vmul.f32 %v1246, 1.442695
  %v1251 = vpow.pop %v1250
  %v1252 = vmul.f32 %v1247, 1.442695
  %v1253 = vpow.pop %v1252
  %v1254 = vmul.f32 %v1248, 1.442695
  %v1255 = vpow.pop %v1254
  %v1256 = vmul.f32 %v1249, 1.442695
  %v1257 = vpow.pop %v1256
  %1262 = vset.pattern.permute.xlu0 0
  %1263 = vperm.xlu0 %1262, %v1251
  %v1264 = vpop.permute.xlu0 %1263
  %1265 = vset.pattern.permute.xlu0 0
  %1266 = vperm.xlu0 %1265, %v1253
  %v1267 = vpop.permute.xlu0 %1266
  %1268 = vset.pattern.permute.xlu0 0
  %1269 = vperm.xlu0 %1268, %v1255
  %v1270 = vpop.permute.xlu0 %1269
  %1271 = vset.pattern.permute.xlu0 0
  %1272 = vperm.xlu0 %1271, %v1257
  %v1273 = vpop.permute.xlu0 %1272
  %v1274 = vperm.slane %v1264, %v1128
  %v1275 = vperm.slane %v1267, %v1130
  %v1276 = vsel %vm1132, %v1275, %v1274
  %v1277 = vperm.slane %v1270, %v1128
  %v1278 = vperm.slane %v1273, %v1130
  %v1279 = vsel %vm1132, %v1278, %v1277
  %v1280 = vsel %vm1034, %v1279, %v1276
  %v1282 = vsel %vm1140, %v1280, 0.0
  %1283 = vadd.xlane.f32.xlu0 %v1282
  %v1284 = vpop.xlane.xlu0 %1283
  %v1285 = vrcp.pop %v1284
  %v1287 = vperm.slane %v1285, 0
  %v1288 = vperm.slane %v1285, 1
  %v1291 = vmul.f32 %v1251, %v1287
  %v1292 = vmul.f32 %v1253, %v1287
  %v1293 = vmul.f32 %v1255, %v1288
  %v1294 = vmul.f32 %v1257, %v1288
  %1296 = vset.pattern.permute.xlu0 0
  %1297 = vperm.xlu0 %1296, %v1291
  %v1298 = vpop.permute.xlu0 %1297
  %1301 = vset.pattern.permute.xlu0 0
  %1302 = vperm.xlu0 %1301, %v1292
  %v1303 = vpop.permute.xlu0 %1302
  %1306 = vset.pattern.permute.xlu0 0
  %1307 = vperm.xlu0 %1306, %v1293
  %v1308 = vpop.permute.xlu0 %1307
  %1311 = vset.pattern.permute.xlu0 0
  %1312 = vperm.xlu0 %1311, %v1294
  %v1313 = vpop.permute.xlu0 %1312
  %v1315 = vmul.f32 %v1298, %v33
  %v1316 = vmul.f32 %v1303, %v34
  %v1317 = vmul.f32 %v1308, %v35
  %v1318 = vmul.f32 %v1313, %v36
  %v1319 = vsel %vm65, %v1315, 0.0
  %v1320 = vsel %vm65, %v1316, 0.0
  %v1321 = vadd.f32 %v1319, %v1320
  %v1322 = vrot.slane %v1321, 4
  %v1323 = vadd.f32 %v1321, %v1322
  %v1324 = vrot.slane %v1323, 2
  %v1325 = vadd.f32 %v1323, %v1324
  %v1326 = vrot.slane %v1325, 1
  %v1327 = vadd.f32 %v1325, %v1326
  %v1328 = vsel %vm65, %v1317, 0.0
  %v1329 = vsel %vm65, %v1318, 0.0
  %v1330 = vadd.f32 %v1328, %v1329
  %v1331 = vrot.slane %v1330, 4
  %v1332 = vadd.f32 %v1330, %v1331
  %v1333 = vrot.slane %v1332, 2
  %v1334 = vadd.f32 %v1332, %v1333
  %v1335 = vrot.slane %v1334, 1
  %v1336 = vadd.f32 %v1334, %v1335
  %v1337 = vperm.slane %v62, 0
  %v1338 = vmul.f32 %v37, %v1337
  %v1339 = vmul.f32 %v38, %v1337
  %v1340 = vmul.f32 %v39, %v1337
  %v1341 = vmul.f32 %v40, %v1337
  %v1342 = vsel %vm65, %v1338, 0.0
  %1343 = vadd.xlane.f32.xlu0 %v1342
  %v1344 = vpop.xlane.xlu0 %1343
  %v1345 = vsel %vm65, %v1339, 0.0
  %1346 = vadd.xlane.f32.xlu0 %v1345
  %v1347 = vpop.xlane.xlu0 %1346
  %v1348 = vsel %vm65, %v1340, 0.0
  %1349 = vadd.xlane.f32.xlu0 %v1348
  %v1350 = vpop.xlane.xlu0 %1349
  %v1351 = vsel %vm65, %v1341, 0.0
  %1352 = vadd.xlane.f32.xlu0 %v1351
  %v1353 = vpop.xlane.xlu0 %1352
  %1354 = vrot.lane.b32.xlu0 %v1115, 126
  %v1355 = vpop.permute.xlu0 %1354
  %s1356 = vtos %v1355
  %v1357 = vstv %s1356
  %v1359 = vadd.f32 %v1344, %v1357
  %v1360 = vadd.f32 %v1347, %v1357
  %v1361 = vadd.f32 %v1350, %v1357
  %v1362 = vadd.f32 %v1353, %v1357
  %v1367 = vperm.slane %v1359, %v1128
  %v1368 = vperm.slane %v1360, %v1130
  %v1369 = vsel %vm1132, %v1368, %v1367
  %v1370 = vperm.slane %v1361, %v1128
  %v1371 = vperm.slane %v1362, %v1130
  %v1372 = vsel %vm1132, %v1371, %v1370
  %v1373 = vsel %vm1034, %v1372, %v1369
  %v1375 = vsel %vm1140, %v1373, -inf
  %1376 = vmax.xlane.f32.xlu0 %v1375
  %v1377 = vpop.xlane.xlu0 %1376
  %v1379 = vperm.slane %v1377, 0
  %v1380 = vperm.slane %v1377, 1
  %v1383 = vsub.f32 %v1359, %v1379
  %v1384 = vsub.f32 %v1360, %v1379
  %v1385 = vsub.f32 %v1361, %v1380
  %v1386 = vsub.f32 %v1362, %v1380
  %v1387 = vmul.f32 %v1383, 1.442695
  %v1388 = vpow.pop %v1387
  %v1389 = vmul.f32 %v1384, 1.442695
  %v1390 = vpow.pop %v1389
  %v1391 = vmul.f32 %v1385, 1.442695
  %v1392 = vpow.pop %v1391
  %v1393 = vmul.f32 %v1386, 1.442695
  %v1394 = vpow.pop %v1393
  %1399 = vset.pattern.permute.xlu0 0
  %1400 = vperm.xlu0 %1399, %v1388
  %v1401 = vpop.permute.xlu0 %1400
  %1402 = vset.pattern.permute.xlu0 0
  %1403 = vperm.xlu0 %1402, %v1390
  %v1404 = vpop.permute.xlu0 %1403
  %1405 = vset.pattern.permute.xlu0 0
  %1406 = vperm.xlu0 %1405, %v1392
  %v1407 = vpop.permute.xlu0 %1406
  %1408 = vset.pattern.permute.xlu0 0
  %1409 = vperm.xlu0 %1408, %v1394
  %v1410 = vpop.permute.xlu0 %1409
  %v1411 = vperm.slane %v1401, %v1128
  %v1412 = vperm.slane %v1404, %v1130
  %v1413 = vsel %vm1132, %v1412, %v1411
  %v1414 = vperm.slane %v1407, %v1128
  %v1415 = vperm.slane %v1410, %v1130
  %v1416 = vsel %vm1132, %v1415, %v1414
  %v1417 = vsel %vm1034, %v1416, %v1413
  %v1419 = vsel %vm1140, %v1417, 0.0
  %1420 = vadd.xlane.f32.xlu0 %v1419
  %v1421 = vpop.xlane.xlu0 %1420
  %v1422 = vrcp.pop %v1421
  %v1424 = vperm.slane %v1422, 0
  %v1425 = vperm.slane %v1422, 1
  %v1428 = vmul.f32 %v1388, %v1424
  %v1429 = vmul.f32 %v1390, %v1424
  %v1430 = vmul.f32 %v1392, %v1425
  %v1431 = vmul.f32 %v1394, %v1425
  %1433 = vset.pattern.permute.xlu0 0
  %1434 = vperm.xlu0 %1433, %v1428
  %v1435 = vpop.permute.xlu0 %1434
  %1438 = vset.pattern.permute.xlu0 0
  %1439 = vperm.xlu0 %1438, %v1429
  %v1440 = vpop.permute.xlu0 %1439
  %1443 = vset.pattern.permute.xlu0 0
  %1444 = vperm.xlu0 %1443, %v1430
  %v1445 = vpop.permute.xlu0 %1444
  %1448 = vset.pattern.permute.xlu0 0
  %1449 = vperm.xlu0 %1448, %v1431
  %v1450 = vpop.permute.xlu0 %1449
  %v1452 = vmul.f32 %v1435, %v37
  %v1453 = vmul.f32 %v1440, %v38
  %v1454 = vmul.f32 %v1445, %v39
  %v1455 = vmul.f32 %v1450, %v40
  %v1456 = vsel %vm65, %v1452, 0.0
  %v1457 = vsel %vm65, %v1453, 0.0
  %v1458 = vadd.f32 %v1456, %v1457
  %v1459 = vrot.slane %v1458, 4
  %v1460 = vadd.f32 %v1458, %v1459
  %v1461 = vrot.slane %v1460, 2
  %v1462 = vadd.f32 %v1460, %v1461
  %v1463 = vrot.slane %v1462, 1
  %v1464 = vadd.f32 %v1462, %v1463
  %v1465 = vsel %vm65, %v1454, 0.0
  %v1466 = vsel %vm65, %v1455, 0.0
  %v1467 = vadd.f32 %v1465, %v1466
  %v1468 = vrot.slane %v1467, 4
  %v1469 = vadd.f32 %v1467, %v1468
  %v1470 = vrot.slane %v1469, 2
  %v1471 = vadd.f32 %v1469, %v1470
  %v1472 = vrot.slane %v1471, 1
  %v1473 = vadd.f32 %v1471, %v1472
  %1475 = vrot.lane.b32.xlu0 %v1095, 64
  %v1476 = vpop.permute.xlu0 %1475
  %v1480 = vsel %vm1034, %v1336, %v1327
  %1481 = vrot.lane.b32.xlu0 %v1480, 64
  %v1482 = vpop.permute.xlu0 %1481
  %v1486 = vsel %vm1034, %v1473, %v1464
  %1487 = vrot.lane.b32.xlu0 %v1486, 96
  %v1488 = vpop.permute.xlu0 %1487
  %v1490 = vsel %vm1056, %v1476, %v1482
  %v1491 = vsel %vm1058, %v1490, %v1488
  %v1492 = vld [vmem:[%s4] sm:$0xff]
  %v1493 = vld [vmem:[%s4 + $0x8] sm:$0xff]
  %v1494 = vld [vmem:[%s4 + $0x10] sm:$0xff]
  %v1495 = vld [vmem:[%s4 + $0x18] sm:$0xff]
  %v1496 = vld [vmem:[%s4 + $0x20] sm:$0xff]
  %v1497 = vld [vmem:[%s4 + $0x28] sm:$0xff]
  %v1498 = vld [vmem:[%s4 + $0x30] sm:$0xff]
  %v1499 = vld [vmem:[%s4 + $0x38] sm:$0xff]
  %v1500 = vld [vmem:[%s4 + $0x40] sm:$0xff]
  %v1501 = vld [vmem:[%s4 + $0x48] sm:$0xff]
  %v1502 = vld [vmem:[%s4 + $0x50] sm:$0xff]
  %v1503 = vld [vmem:[%s4 + $0x58] sm:$0xff]
  %v1504 = vld [vmem:[%s4 + $0x60] sm:$0xff]
  %v1505 = vld [vmem:[%s4 + $0x68] sm:$0xff]
  %v1506 = vld [vmem:[%s4 + $0x70] sm:$0xff]
  %v1507 = vld [vmem:[%s4 + $0x78] sm:$0xff]
  %v1508 = vld [vmem:[%s4 + $0x80] sm:$0xff]
  %v1509 = vld [vmem:[%s4 + $0x88] sm:$0xff]
  %v1510 = vld [vmem:[%s4 + $0x90] sm:$0xff]
  %v1511 = vld [vmem:[%s4 + $0x98] sm:$0xff]
  %v1512 = vld [vmem:[%s4 + $0xa0] sm:$0xff]
  %v1513 = vld [vmem:[%s4 + $0xa8] sm:$0xff]
  %v1514 = vld [vmem:[%s4 + $0xb0] sm:$0xff]
  %v1515 = vld [vmem:[%s4 + $0xb8] sm:$0xff]
  %v1516 = vld [vmem:[%s4 + $0xc0] sm:$0xff]
  %v1517 = vld [vmem:[%s4 + $0xc8] sm:$0xff]
  %v1518 = vld [vmem:[%s4 + $0xd0] sm:$0xff]
  %v1519 = vld [vmem:[%s4 + $0xd8] sm:$0xff]
  %v1520 = vld [vmem:[%s4 + $0xe0] sm:$0xff]
  %v1521 = vld [vmem:[%s4 + $0xe8] sm:$0xff]
  %v1522 = vld [vmem:[%s4 + $0xf0] sm:$0xff]
  %v1523 = vld [vmem:[%s4 + $0xf8] sm:$0xff]
  %v1524 = vperm.slane %v60, 4
  %v1525 = vperm.slane %v61, 4
  %1526 = vmatpush.msra.mxu0 %v1522
  %1527 = vmatpush.msra.mxu0 %v1520
  %1528 = vmatpush.msra.mxu0 %v1518
  %1529 = vmatpush.msra.mxu0 %v1516
  %1530 = vmatpush.msra.mxu0 %v1514
  %1531 = vmatpush.msra.mxu0 %v1512
  %1532 = vmatpush.msra.mxu0 %v1510
  %1533 = vmatpush.msra.mxu0 %v1508
  %1534 = vmatpush.msra.mxu0 %v1506
  %1535 = vmatpush.msra.mxu0 %v1504
  %1536 = vmatpush.msra.mxu0 %v1502
  %1537 = vmatpush.msra.mxu0 %v1500
  %1538 = vmatpush.msra.mxu0 %v1498
  %1539 = vmatpush.msra.mxu0 %v1496
  %1540 = vmatpush.msra.mxu0 %v1494
  %1541 = vmatpush.msra.mxu0 %v1492
  %1542 = vmatmul.f32.gmra.mxu0 %v1491
  %v1543 = vpop.f32.mrf.mxu0
  %v1544 = vadd.f32 %v1524, %v1543
  %1545 = vdwg.mxu0
  %1546 = vmatpush.msra.mxu0 %v1523
  %1547 = vmatpush.msra.mxu0 %v1521
  %1548 = vmatpush.msra.mxu0 %v1519
  %1549 = vmatpush.msra.mxu0 %v1517
  %1550 = vmatpush.msra.mxu0 %v1515
  %1551 = vmatpush.msra.mxu0 %v1513
  %1552 = vmatpush.msra.mxu0 %v1511
  %1553 = vmatpush.msra.mxu0 %v1509
  %1554 = vmatpush.msra.mxu0 %v1507
  %1555 = vmatpush.msra.mxu0 %v1505
  %1556 = vmatpush.msra.mxu0 %v1503
  %1557 = vmatpush.msra.mxu0 %v1501
  %1558 = vmatpush.msra.mxu0 %v1499
  %1559 = vmatpush.msra.mxu0 %v1497
  %1560 = vmatpush.msra.mxu0 %v1495
  %1561 = vmatpush.msra.mxu0 %v1493
  %1562 = vmatmul.f32.gmra.mxu0 %v1491
  %v1563 = vpop.f32.mrf.mxu0
  %v1564 = vadd.f32 %v1525, %v1563
  %1565 = vdwg.mxu0
  %v1566 = vmax.f32 %v1544, 0.0
  %v1567 = vmax.f32 %v1564, 0.0
  %v1568 = vld [vmem:[%s5] sm:$0xff]
  %v1569 = vld [vmem:[%s5 + $0x8] sm:$0xff]
  %v1570 = vld [vmem:[%s5 + $0x10] sm:$0xff]
  %v1571 = vld [vmem:[%s5 + $0x18] sm:$0xff]
  %v1572 = vld [vmem:[%s5 + $0x20] sm:$0xff]
  %v1573 = vld [vmem:[%s5 + $0x28] sm:$0xff]
  %v1574 = vld [vmem:[%s5 + $0x30] sm:$0xff]
  %v1575 = vld [vmem:[%s5 + $0x38] sm:$0xff]
  %v1576 = vld [vmem:[%s5 + $0x40] sm:$0xff]
  %v1577 = vld [vmem:[%s5 + $0x48] sm:$0xff]
  %v1578 = vld [vmem:[%s5 + $0x50] sm:$0xff]
  %v1579 = vld [vmem:[%s5 + $0x58] sm:$0xff]
  %v1580 = vld [vmem:[%s5 + $0x60] sm:$0xff]
  %v1581 = vld [vmem:[%s5 + $0x68] sm:$0xff]
  %v1582 = vld [vmem:[%s5 + $0x70] sm:$0xff]
  %v1583 = vld [vmem:[%s5 + $0x78] sm:$0xff]
  %v1584 = vld [vmem:[%s5 + $0x80] sm:$0xff]
  %v1585 = vld [vmem:[%s5 + $0x88] sm:$0xff]
  %v1586 = vld [vmem:[%s5 + $0x90] sm:$0xff]
  %v1587 = vld [vmem:[%s5 + $0x98] sm:$0xff]
  %v1588 = vld [vmem:[%s5 + $0xa0] sm:$0xff]
  %v1589 = vld [vmem:[%s5 + $0xa8] sm:$0xff]
  %v1590 = vld [vmem:[%s5 + $0xb0] sm:$0xff]
  %v1591 = vld [vmem:[%s5 + $0xb8] sm:$0xff]
  %v1592 = vld [vmem:[%s5 + $0xc0] sm:$0xff]
  %v1593 = vld [vmem:[%s5 + $0xc8] sm:$0xff]
  %v1594 = vld [vmem:[%s5 + $0xd0] sm:$0xff]
  %v1595 = vld [vmem:[%s5 + $0xd8] sm:$0xff]
  %v1596 = vld [vmem:[%s5 + $0xe0] sm:$0xff]
  %v1597 = vld [vmem:[%s5 + $0xe8] sm:$0xff]
  %v1598 = vld [vmem:[%s5 + $0xf0] sm:$0xff]
  %v1599 = vld [vmem:[%s5 + $0xf8] sm:$0xff]
  %v1600 = vld [vmem:[%s5 + $0x100] sm:$0xff]
  %v1601 = vld [vmem:[%s5 + $0x108] sm:$0xff]
  %v1602 = vld [vmem:[%s5 + $0x110] sm:$0xff]
  %v1603 = vld [vmem:[%s5 + $0x118] sm:$0xff]
  %v1604 = vld [vmem:[%s5 + $0x120] sm:$0xff]
  %v1605 = vld [vmem:[%s5 + $0x128] sm:$0xff]
  %v1606 = vld [vmem:[%s5 + $0x130] sm:$0xff]
  %v1607 = vld [vmem:[%s5 + $0x138] sm:$0xff]
  %v1608 = vld [vmem:[%s5 + $0x140] sm:$0xff]
  %v1609 = vld [vmem:[%s5 + $0x148] sm:$0xff]
  %v1610 = vld [vmem:[%s5 + $0x150] sm:$0xff]
  %v1611 = vld [vmem:[%s5 + $0x158] sm:$0xff]
  %v1612 = vld [vmem:[%s5 + $0x160] sm:$0xff]
  %v1613 = vld [vmem:[%s5 + $0x168] sm:$0xff]
  %v1614 = vld [vmem:[%s5 + $0x170] sm:$0xff]
  %v1615 = vld [vmem:[%s5 + $0x178] sm:$0xff]
  %v1616 = vperm.slane %v60, 5
  %v1617 = vperm.slane %v61, 5
  %v1619 = vsel %vm1056, %v1567, 0
  %1621 = vmatpush.msra.mxu0 %v1598
  %1622 = vmatpush.msra.mxu0 %v1596
  %1623 = vmatpush.msra.mxu0 %v1594
  %1624 = vmatpush.msra.mxu0 %v1592
  %1625 = vmatpush.msra.mxu0 %v1590
  %1626 = vmatpush.msra.mxu0 %v1588
  %1627 = vmatpush.msra.mxu0 %v1586
  %1628 = vmatpush.msra.mxu0 %v1584
  %1629 = vmatpush.msra.mxu0 %v1582
  %1630 = vmatpush.msra.mxu0 %v1580
  %1631 = vmatpush.msra.mxu0 %v1578
  %1632 = vmatpush.msra.mxu0 %v1576
  %1633 = vmatpush.msra.mxu0 %v1574
  %1634 = vmatpush.msra.mxu0 %v1572
  %1635 = vmatpush.msra.mxu0 %v1570
  %1636 = vmatpush.msra.mxu0 %v1568
  %1637 = vmatmul.f32.gmra.mxu0 %v1566
  %v1638 = vpop.f32.mrf.mxu0
  %v1639 = vadd.f32 %v1616, %v1638
  %1640 = vdwg.mxu0
  %1641 = vmatpush.msra.mxu0 0.0
  %1642 = vmatpush.msra.mxu0 0.0
  %1643 = vmatpush.msra.mxu0 0.0
  %1644 = vmatpush.msra.mxu0 0.0
  %1645 = vmatpush.msra.mxu0 0.0
  %1646 = vmatpush.msra.mxu0 0.0
  %1647 = vmatpush.msra.mxu0 0.0
  %1648 = vmatpush.msra.mxu0 0.0
  %1649 = vmatpush.msra.mxu0 %v1614
  %1650 = vmatpush.msra.mxu0 %v1612
  %1651 = vmatpush.msra.mxu0 %v1610
  %1652 = vmatpush.msra.mxu0 %v1608
  %1653 = vmatpush.msra.mxu0 %v1606
  %1654 = vmatpush.msra.mxu0 %v1604
  %1655 = vmatpush.msra.mxu0 %v1602
  %1656 = vmatpush.msra.mxu0 %v1600
  %1657 = vmatmul.f32.gmra.mxu0 %v1619
  %v1658 = vpop.f32.mrf.mxu0
  %v1659 = vadd.f32 %v1639, %v1658
  %1660 = vdwg.mxu0
  %1661 = vmatpush.msra.mxu0 %v1599
  %1662 = vmatpush.msra.mxu0 %v1597
  %1663 = vmatpush.msra.mxu0 %v1595
  %1664 = vmatpush.msra.mxu0 %v1593
  %1665 = vmatpush.msra.mxu0 %v1591
  %1666 = vmatpush.msra.mxu0 %v1589
  %1667 = vmatpush.msra.mxu0 %v1587
  %1668 = vmatpush.msra.mxu0 %v1585
  %1669 = vmatpush.msra.mxu0 %v1583
  %1670 = vmatpush.msra.mxu0 %v1581
  %1671 = vmatpush.msra.mxu0 %v1579
  %1672 = vmatpush.msra.mxu0 %v1577
  %1673 = vmatpush.msra.mxu0 %v1575
  %1674 = vmatpush.msra.mxu0 %v1573
  %1675 = vmatpush.msra.mxu0 %v1571
  %1676 = vmatpush.msra.mxu0 %v1569
  %1677 = vmatmul.f32.gmra.mxu0 %v1566
  %v1678 = vpop.f32.mrf.mxu0
  %v1679 = vadd.f32 %v1617, %v1678
  %1680 = vdwg.mxu0
  %1681 = vmatpush.msra.mxu0 0.0
  %1682 = vmatpush.msra.mxu0 0.0
  %1683 = vmatpush.msra.mxu0 0.0
  %1684 = vmatpush.msra.mxu0 0.0
  %1685 = vmatpush.msra.mxu0 0.0
  %1686 = vmatpush.msra.mxu0 0.0
  %1687 = vmatpush.msra.mxu0 0.0
  %1688 = vmatpush.msra.mxu0 0.0
  %1689 = vmatpush.msra.mxu0 %v1615
  %1690 = vmatpush.msra.mxu0 %v1613
  %1691 = vmatpush.msra.mxu0 %v1611
  %1692 = vmatpush.msra.mxu0 %v1609
  %1693 = vmatpush.msra.mxu0 %v1607
  %1694 = vmatpush.msra.mxu0 %v1605
  %1695 = vmatpush.msra.mxu0 %v1603
  %1696 = vmatpush.msra.mxu0 %v1601
  %1697 = vmatmul.f32.gmra.mxu0 %v1619
  %v1698 = vpop.f32.mrf.mxu0
  %v1699 = vadd.f32 %v1679, %v1698
  %1700 = vdwg.mxu0
  %v1701 = vmax.f32 %v1659, 0.0
  %v1702 = vsub.f32 0.0, %v1699
  %v1703 = vmul.f32 %v1702, 1.442695
  %v1704 = vpow.pop %v1703
  %v1705 = vadd.f32 %v1704, 1.0
  %v1706 = vrcp.pop %v1705
  %v1707 = vperm.slane %v62, 2
  %v1708 = vmul.f32 %v1701, %v1707
  %vm1709 = vcmask 517120
  %v1710 = vsel %vm1709, %v1708, 0.0
  %1711 = vadd.xlane.f32.xlu0 %v1710
  %v1712 = vpop.xlane.xlu0 %1711
  %v1713 = vperm.slane %v62, 6
  %v1714 = vadd.f32 %v1712, %v1713
  %v1715 = vsub.f32 0.0, %v1714
  %v1716 = vmul.f32 %v1715, 1.442695
  %v1717 = vpow.pop %v1716
  %v1718 = vadd.f32 %v1717, 1.0
  %v1719 = vrcp.pop %v1718
  %v1720 = vperm.slane %v62, 3
  %1722 = vrot.lane.b32.xlu0 %v1720, 64
  %v1723 = vpop.permute.xlu0 %1722
  %v1725 = vmul.f32 %v1701, %v1723
  %1727 = vrot.lane.b32.xlu0 %v1725, 64
  %v1728 = vpop.permute.xlu0 %1727
  %v1730 = vsel %vm1709, %v1728, 0.0
  %1731 = vadd.xlane.f32.xlu0 %v1730
  %v1732 = vpop.xlane.xlu0 %1731
  %v1733 = vadd.f32 %v1732, %v1713
  %v1734 = vsub.f32 0.0, %v1733
  %v1735 = vmul.f32 %v1734, 1.442695
  %v1736 = vpow.pop %v1735
  %v1737 = vadd.f32 %v1736, 1.0
  %v1738 = vrcp.pop %v1737
  %1740 = vset.pattern.permute.xlu0 4
  %1741 = vperm.xlu0 %1740, %v1719
  %v1742 = vpop.permute.xlu0 %1741
  %v1744 = vmul.f32 %v1742, %v1095
  %1746 = vset.pattern.permute.xlu0 5
  %1747 = vperm.xlu0 %1746, %v1738
  %v1748 = vpop.permute.xlu0 %1747
  %v1750 = vmul.f32 %v1748, %v1095
  %v1751 = vperm.slane %v62, 1
  %v1752 = vmul.f32 %v1190, %v1751
  %v1753 = vmul.f32 %v1199, %v1751
  %v1756 = vrot.slane %v1753, 7
  %v1757 = vsel %vm1034, %v1756, %v1752
  %vm1759 = vcmask 254976
  %v1760 = vsel %vm1759, %v1757, 0.0
  %1761 = vadd.xlane.f32.xlu0 %v1760
  %v1762 = vpop.xlane.xlu0 %1761
  %v1763 = vadd.f32 %v1762, %v1713
  %v1764 = vmul.f32 %v1744, %v1751
  %v1765 = vsel %vm1759, %v1764, 0.0
  %1766 = vadd.xlane.f32.xlu0 %v1765
  %v1767 = vpop.xlane.xlu0 %1766
  %v1768 = vadd.f32 %v1767, %v1713
  %1770 = vrot.lane.b32.xlu0 %v1751, 32
  %v1771 = vpop.permute.xlu0 %1770
  %v1773 = vmul.f32 %v1750, %v1771
  %1775 = vrot.lane.b32.xlu0 %v1773, 96
  %v1776 = vpop.permute.xlu0 %1775
  %v1778 = vsel %vm1759, %v1776, 0.0
  %1779 = vadd.xlane.f32.xlu0 %v1778
  %v1780 = vpop.xlane.xlu0 %1779
  %v1781 = vadd.f32 %v1780, %v1713
  %v1782 = vmax.f32 %v1763, %v1768
  %v1783 = vmax.f32 %v1782, %v1781
  %v1784 = vsub.f32 %v1763, %v1783
  %v1785 = vmul.f32 %v1784, 1.442695
  %v1786 = vpow.pop %v1785
  %v1787 = vsub.f32 %v1768, %v1783
  %v1788 = vmul.f32 %v1787, 1.442695
  %v1789 = vpow.pop %v1788
  %v1790 = vsub.f32 %v1781, %v1783
  %v1791 = vmul.f32 %v1790, 1.442695
  %v1792 = vpow.pop %v1791
  %v1793 = vadd.f32 %v1786, %v1789
  %v1794 = vadd.f32 %v1793, %v1792
  %v1795 = vrcp.pop %v1794
  %1797 = vset.pattern.permute.xlu0 3
  %1798 = vperm.xlu0 %1797, %v1786
  %v1799 = vpop.permute.xlu0 %1798
  %v1803 = vsel %vm1034, %v1199, %v1190
  %v1805 = vmul.f32 %v1799, %v1803
  %1807 = vset.pattern.permute.xlu0 3
  %1808 = vperm.xlu0 %1807, %v1789
  %v1809 = vpop.permute.xlu0 %1808
  %v1811 = vmul.f32 %v1809, %v1744
  %v1812 = vadd.f32 %v1805, %v1811
  %1814 = vset.pattern.permute.xlu0 3
  %1815 = vperm.xlu0 %1814, %v1792
  %v1816 = vpop.permute.xlu0 %1815
  %v1818 = vmul.f32 %v1816, %v1750
  %1820 = vrot.lane.b32.xlu0 %v1818, 96
  %v1821 = vpop.permute.xlu0 %1820
  %v1823 = vadd.f32 %v1812, %v1821
  %1825 = vset.pattern.permute.xlu0 3
  %1826 = vperm.xlu0 %1825, %v1795
  %v1827 = vpop.permute.xlu0 %1826
  %v1829 = vmul.f32 %v1823, %v1827
  %v1830 = vld [vmem:[%s6] sm:$0xff]
  %v1831 = vld [vmem:[%s6 + $0x8] sm:$0xff]
  %v1832 = vld [vmem:[%s6 + $0x10] sm:$0xff]
  %v1833 = vld [vmem:[%s6 + $0x18] sm:$0xff]
  %v1834 = vperm.slane %v62, 4
  %v1836 = vsel %vm65, %v1829, 0
  %1838 = vmatpush.msra.mxu0 0.0
  %1839 = vmatpush.msra.mxu0 0.0
  %1840 = vmatpush.msra.mxu0 0.0
  %1841 = vmatpush.msra.mxu0 0.0
  %1842 = vmatpush.msra.mxu0 0.0
  %1843 = vmatpush.msra.mxu0 0.0
  %1844 = vmatpush.msra.mxu0 0.0
  %1845 = vmatpush.msra.mxu0 0.0
  %1846 = vmatpush.msra.mxu0 0.0
  %1847 = vmatpush.msra.mxu0 0.0
  %1848 = vmatpush.msra.mxu0 0.0
  %1849 = vmatpush.msra.mxu0 0.0
  %1850 = vmatpush.msra.mxu0 %v1833
  %1851 = vmatpush.msra.mxu0 %v1832
  %1852 = vmatpush.msra.mxu0 %v1831
  %1853 = vmatpush.msra.mxu0 %v1830
  %1854 = vmatmul.f32.gmra.mxu0 %v1836
  %v1855 = vpop.f32.mrf.mxu0
  %v1856 = vadd.f32 %v1834, %v1855
  %1857 = vdwg.mxu0
  %v1858 = vmax.f32 %v1856, 0.0
  %v1859 = vperm.slane %v62, 5
  %v1860 = vmul.f32 %v1858, %v1859
  %v1861 = vsel %vm1759, %v1860, 0.0
  %1862 = vadd.xlane.f32.xlu0 %v1861
  %v1863 = vpop.xlane.xlu0 %1862
  %v1864 = vadd.f32 %v1863, %v1713
  %v1865 = vsub.f32 0.0, %v1864
  %v1866 = vmul.f32 %v1865, 1.442695
  %v1867 = vpow.pop %v1866
  %v1868 = vadd.f32 %v1867, 1.0
  %v1869 = vrcp.pop %v1868
  %1870 = vrot.lane.b32.xlu0 %v1803, 32
  %v1871 = vpop.permute.xlu0 %1870
  %1874 = vrot.lane.b32.xlu0 %v1744, 64
  %v1875 = vpop.permute.xlu0 %1874
  %1878 = vrot.lane.b32.xlu0 %v1750, 64
  %v1879 = vpop.permute.xlu0 %1878
  %1882 = vrot.lane.b32.xlu0 %v1869, 122
  %v1883 = vpop.permute.xlu0 %1882
  %1886 = vrot.lane.b32.xlu0 %v1706, 1
  %v1887 = vpop.permute.xlu0 %1886
  %1889 = vrot.lane.b32.xlu0 %v1719, 127
  %v1890 = vpop.permute.xlu0 %1889
  %1892 = vrot.lane.b32.xlu0 %v1738, 127
  %v1893 = vpop.permute.xlu0 %1892
  %1896 = vrot.lane.b32.xlu0 %v1699, 3
  %v1897 = vpop.permute.xlu0 %1896
  %v1899 = vsel %vm65, %v1829, %v1871
  %v1900 = vsel %vm1056, %v1899, %v1875
  %v1901 = vsel %vm1058, %v1900, %v1879
  %vm1902 = vcmask 7168
  %v1903 = vsel %vm1902, %v1883, %v1887
  %vm1904 = vcmask 23552
  %v1905 = vsel %vm1904, %v1903, %v1890
  %vm1906 = vcmask 31744
  %v1907 = vsel %vm1906, %v1905, %v1893
  %vm1908 = vcmask 39936
  %v1909 = vsel %vm1908, %v1907, %v1897
  %vm1910 = vcmask 89088
  %v1911 = vsel %vm1910, %v1909, 0.0
  %v1914 = vrot.slane %v1911, 6
  %vm1915 = vcmask 1041408
  %v1916 = vsel %vm1915, %v1901, %v1914
  %1918 = vst [vmem:[%s8] sm:$0xf] %v1916
  // Predicated region
  $region34: #{arg_forward.1} parent=0 // pred_check
    _
  $region35: #{arg_forward.1} parent=0 // pred_check_branch
    %1920 = sbr.rel (0) target = $region37
  $region36: #{arg_forward.1} parent=0 // pred_region
    _
  $region37: #{arg_forward.1} parent=0 // pred_fallthru
    _
  // Predicated region
  $region38: #{arg_forward.1} parent=0 // pred_check
    _
  $region39: #{arg_forward.1} parent=0 // pred_check_branch
    %1922 = sbr.rel (0) target = $region41
  $region40: #{arg_forward.1} parent=0 // pred_region
    _
  $region41: #{arg_forward.1} parent=0 // pred_fallthru
    _

</llo_original>
